<compile_context>
chip_gen: v5e
topology: v5e:2x2
jax: 0.10.0
libtpu: 0.0.40
codegen_flags: <defaults>
</compile_context>

<pallas_src>
import jax
import jax.numpy as jnp
import numpy as np
from jax import lax
from jax.experimental import pallas as pl
from jax.experimental.pallas import tpu as pltpu

_EPS_NORM = 1e-12   # torch F.normalize eps (max(norm, eps) form)
_EPS_LN = 1e-5      # torch nn.LayerNorm default eps


def _round_up(n, m):
    return ((n + m - 1) // m) * m


def _register_kernel(x_ref, w_lin_ref, vec_ref, info_t_ref, info_n_ref,
                     w_ffn_ref, b_ffn_ref, o_ref):
    # One (TM, in_dim) row slab per grid step; weights/info are grid-invariant.
    xs = x_ref[...]                                                       # (TM, in_dim) f32

    b_lin = vec_ref[0:1, :]                                               # packed small vectors
    ln2_w = vec_ref[1:2, :]
    ln2_b = vec_ref[2:3, :]

    # h = self.linear(x)
    h = jnp.dot(xs, w_lin_ref[...], preferred_element_type=jnp.float32) + b_lin

    # h = F.normalize(h, p=2, dim=-1)
    #   h / max(||h||, eps)  ==  h * rsqrt(max(sum(h^2), eps^2))   (sqrt monotone)
    ss = jnp.sum(h * h, axis=-1, keepdims=True)
    hn = h * lax.rsqrt(jnp.maximum(ss, _EPS_NORM * _EPS_NORM))

    # scores = hn @ info_n^T  (info already normalized + pre-transposed in wrapper)
    # Both operands are unit-norm, so scores ∈ [-1, 1]: skip the softmax max-subtract.
    scores = jnp.dot(hn, info_t_ref[...], preferred_element_type=jnp.float32)   # (TM, num)
    e = jnp.exp(scores)
    attn = e / jnp.sum(e, axis=-1, keepdims=True)

    # out = attn @ info_n
    out = jnp.dot(attn, info_n_ref[...], preferred_element_type=jnp.float32)    # (TM, dim)

    # ln_2 (fp32, default eps, elementwise affine) — single data pass for the stats
    inv_dim = 1.0 / out.shape[-1]
    mu = jnp.sum(out, axis=-1, keepdims=True) * inv_dim
    ex2 = jnp.sum(out * out, axis=-1, keepdims=True) * inv_dim
    var = jnp.maximum(ex2 - mu * mu, 0.0)
    ln = (out - mu) * lax.rsqrt(var + _EPS_LN) * ln2_w + ln2_b

    # ffn(ln) + residual, relu
    y = jnp.dot(ln, w_ffn_ref[...], preferred_element_type=jnp.float32) + b_ffn_ref[...]
    o_ref[...] = jnp.maximum(y + xs, 0.0)


def register_forward(x, shared_info, params, *, tm=1024):
    """x: (batch, seq, in_dim) f32, shared_info: (num, dim) f32."""
    # ---- grid-invariant prep (hoisted out of the kernel, computed once) ----
    base = params["store_info"] @ params["w_base"] + params["b_base"]        # (num, dim-share)
    share = shared_info @ params["w_share"] + params["b_share"]              # (num, share)
    info = jnp.concatenate([base, share], axis=-1).astype(jnp.float32)       # (num, dim)
    info_n = info / jnp.maximum(
        jnp.linalg.norm(info, axis=-1, keepdims=True), _EPS_NORM)            # F.normalize
    info_t = info_n.T                                                        # (dim, num)

    batch, seq, in_dim = x.shape
    num, dim = info_n.shape

    # ---- layout: flatten batch*seq -> rows; feature axis kept unpadded ----
    rows = batch * seq
    tm = max(8, min(tm, _round_up(rows, 8)))
    if _round_up(rows, tm) // tm < 2 and rows > 8:
        # Force >= 2 grid steps so the parallel axis shards across both v7x TCs.
        tm = _round_up(-(-rows // 2), 8)
    rows_p = _round_up(rows, tm)
    grid = rows_p // tm

    x2 = x.reshape(rows, in_dim).astype(jnp.float32)
    if rows_p != rows:
        x2 = jnp.pad(x2, ((0, rows_p - rows), (0, 0)))   # padded rows: finite garbage, sliced off

    # Pack the three (1, dim) vectors into a single input (fewer DMA windows).
    vecs = jnp.concatenate(
        [params["b_lin"], params["ln2_w"], params["ln2_b"]], axis=0)          # (3, dim)

    full = lambda r: (0, 0)
    out = pl.pallas_call(
        _register_kernel,
        out_shape=jax.ShapeDtypeStruct((rows_p, in_dim), jnp.float32),
        grid_spec=pltpu.PrefetchScalarGridSpec(
            num_scalar_prefetch=0,
            grid=(grid,),
            in_specs=[
                pl.BlockSpec((tm, in_dim), lambda r: (r, 0)),   # x row slab
                pl.BlockSpec((in_dim, dim), full),              # linear weight (in, out)
                pl.BlockSpec((3, dim), full),                   # [b_lin; ln2_w; ln2_b]
                pl.BlockSpec((dim, num), full),                 # normalized info, transposed
                pl.BlockSpec((num, dim), full),                 # normalized info
                pl.BlockSpec((dim, in_dim), full),              # ffn weight (in, out)
                pl.BlockSpec((1, in_dim), full),                # ffn bias
            ],
            out_specs=pl.BlockSpec((tm, in_dim), lambda r: (r, 0)),
        ),
        compiler_params=pltpu.CompilerParams(dimension_semantics=("parallel",)),
    )(x2, params["w_lin"], vecs, info_t, info_n, params["w_ffn"], params["b_ffn"])

    if rows_p != rows:
        out = out[:rows]
    return out.reshape(batch, seq, in_dim)


def _kaiming_normal(key, out_dim, in_dim):
    # torch.nn.init.kaiming_normal_ default: fan_in, leaky_relu(a=0) -> std = sqrt(2/fan_in)
    std = np.sqrt(2.0 / in_dim)
    w_pt = std * jax.random.normal(key, (out_dim, in_dim), jnp.float32)      # torch shape (out,in)
    return w_pt.T                                                            # stored as (in,out)


def _linear_bias(key, in_dim, out_dim):
    bound = 1.0 / np.sqrt(in_dim)
    return jax.random.uniform(key, (1, out_dim), jnp.float32, -bound, bound)


def make_params(key, num, in_dim, dim, share_dim):
    ks = jax.random.split(key, 9)
    return {
        "store_info": jax.random.normal(ks[0], (num, dim), jnp.float32),
        "w_lin": _kaiming_normal(ks[1], dim, in_dim),
        "b_lin": _linear_bias(ks[2], in_dim, dim),
        "w_base": _kaiming_normal(ks[3], dim - share_dim, dim),
        "b_base": _linear_bias(ks[4], dim, dim - share_dim),
        "w_share": _kaiming_normal(ks[5], share_dim, dim),
        "b_share": _linear_bias(ks[6], dim, share_dim),
        "ln2_w": jnp.ones((1, dim), jnp.float32),
        "ln2_b": jnp.zeros((1, dim), jnp.float32),
        "w_ffn": _kaiming_normal(ks[7], in_dim, dim),
        "b_ffn": _linear_bias(ks[8], dim, in_dim),
    }


def register_forward_ref(x, shared_info, params):
    """Pure-JAX reference of the PyTorch forward, for verification."""
    base = params["store_info"] @ params["w_base"] + params["b_base"]
    share = shared_info @ params["w_share"] + params["b_share"]
    info = jnp.concatenate([base, share], axis=-1)
    h = x @ params["w_lin"] + params["b_lin"]
    hn = h / jnp.maximum(jnp.linalg.norm(h, axis=-1, keepdims=True), _EPS_NORM)
    inn = info / jnp.maximum(jnp.linalg.norm(info, axis=-1, keepdims=True), _EPS_NORM)
    scores = jnp.einsum("bsd,nd->bsn", hn, inn)
    attn = jax.nn.softmax(scores, axis=-1)
    out = jnp.einsum("bsn,nd->bsd", attn, inn)
    mu = jnp.mean(out, axis=-1, keepdims=True)
    var = jnp.mean((out - mu) ** 2, axis=-1, keepdims=True)
    ln = (out - mu) / jnp.sqrt(var + _EPS_LN) * params["ln2_w"] + params["ln2_b"]
    y = ln @ params["w_ffn"] + params["b_ffn"]
    return jnp.maximum(y + x, 0.0)


if __name__ == "__main__":
    # Small but non-degenerate shapes: rows = batch*seq = 512 -> two 256-row tiles
    # (grid of 2 keeps both v7x TensorCores busy; tiles are sublane-aligned and
    # large enough to amortize per-step overhead).
    batch, seq, in_dim, dim, share_dim, num = 2, 256, 32, 32, 16, 16

    key = jax.random.PRNGKey(0)
    k_x, k_s, k_p = jax.random.split(key, 3)
    x = jax.random.normal(k_x, (batch, seq, in_dim), jnp.float32)
    shared_info = jax.random.normal(k_s, (num, dim), jnp.float32)
    params = make_params(k_p, num, in_dim, dim, share_dim)

    out = register_forward(x, shared_info, params)
    out = jax.block_until_ready(out)

    ref = register_forward_ref(x, shared_info, params)
    # No approximate reciprocals left in the kernel, so parity is tight.
    np.testing.assert_allclose(np.asarray(out), np.asarray(ref), rtol=2e-3, atol=2e-3)

    print("KERNEL_OK")
</pallas_src>

<mosaic_0001>
module attributes {stable_mosaic.version = 11 : i64} {
  func.func @_register_kernel(%arg0: i32, %arg1: memref<256x32xf32, #tpu.memory_space<vmem>>, %arg2: memref<32x32xf32, #tpu.memory_space<vmem>>, %arg3: memref<3x32xf32, #tpu.memory_space<vmem>>, %arg4: memref<32x16xf32, #tpu.memory_space<vmem>>, %arg5: memref<16x32xf32, #tpu.memory_space<vmem>>, %arg6: memref<32x32xf32, #tpu.memory_space<vmem>>, %arg7: memref<1x32xf32, #tpu.memory_space<vmem>>, %arg8: memref<256x32xf32, #tpu.memory_space<vmem>>) attributes {dimension_semantics = [#tpu.dimension_semantics<parallel>], iteration_bounds = array<i64: 2>, scalar_prefetch = 0 : i64, scratch_operands = 0 : i64, tpu.core_type = #tpu.core_type<tc>, window_params = [{transform_indices = @transform_0, window_bounds = array<i64: 256, 32>}, {pipeline_mode = #tpu.pipeline_mode<synchronous>, transform_indices = @transform_1, window_bounds = array<i64: 32, 32>}, {pipeline_mode = #tpu.pipeline_mode<synchronous>, transform_indices = @transform_2, window_bounds = array<i64: 3, 32>}, {pipeline_mode = #tpu.pipeline_mode<synchronous>, transform_indices = @transform_3, window_bounds = array<i64: 32, 16>}, {pipeline_mode = #tpu.pipeline_mode<synchronous>, transform_indices = @transform_4, window_bounds = array<i64: 16, 32>}, {pipeline_mode = #tpu.pipeline_mode<synchronous>, transform_indices = @transform_5, window_bounds = array<i64: 32, 32>}, {pipeline_mode = #tpu.pipeline_mode<synchronous>, transform_indices = @transform_6, window_bounds = array<i64: 1, 32>}, {transform_indices = @transform_7, window_bounds = array<i64: 256, 32>}]} {
    %c0 = arith.constant 0 : index
    %c0_0 = arith.constant 0 : index
    %0 = vector.load %arg1[%c0, %c0_0] : memref<256x32xf32, #tpu.memory_space<vmem>>, vector<256x32xf32>
    %c0_1 = arith.constant 0 : index
    %c0_2 = arith.constant 0 : index
    %1 = vector.load %arg3[%c0_1, %c0_2] : memref<3x32xf32, #tpu.memory_space<vmem>>, vector<1x32xf32>
    %c1 = arith.constant 1 : index
    %c0_3 = arith.constant 0 : index
    %2 = vector.load %arg3[%c1, %c0_3] : memref<3x32xf32, #tpu.memory_space<vmem>>, vector<1x32xf32>
    %c2 = arith.constant 2 : index
    %c0_4 = arith.constant 0 : index
    %3 = vector.load %arg3[%c2, %c0_4] : memref<3x32xf32, #tpu.memory_space<vmem>>, vector<1x32xf32>
    %c0_5 = arith.constant 0 : index
    %c0_6 = arith.constant 0 : index
    %4 = vector.load %arg2[%c0_5, %c0_6] : memref<32x32xf32, #tpu.memory_space<vmem>>, vector<32x32xf32>
    %cst = arith.constant dense<0.000000e+00> : vector<256x32xf32>
    %5 = tpu.matmul %0, %4, %cst {dimension_numbers = #tpu.dot_dimension_numbers<[1], [0], [0], [1], [0, 0, 1, 1], [], []>} : vector<256x32xf32>, vector<32x32xf32>, vector<256x32xf32> -> vector<256x32xf32>
    %6 = vector.broadcast %1 : vector<1x32xf32> to vector<256x32xf32>
    %7 = arith.addf %5, %6 : vector<256x32xf32>
    %8 = arith.mulf %7, %7 : vector<256x32xf32>
    %cst_7 = arith.constant dense<0.000000e+00> : vector<256xf32>
    %9 = vector.multi_reduction <add>, %8, %cst_7 [1] : vector<256x32xf32> to vector<256xf32>
    %10 = vector.shape_cast %9 : vector<256xf32> to vector<256x1xf32>
    %cst_8 = arith.constant 1.000000e-24 : f32
    %11 = vector.broadcast %cst_8 : f32 to vector<256x1xf32>
    %12 = arith.maximumf %10, %11 : vector<256x1xf32>
    %13 = math.rsqrt %12 : vector<256x1xf32>
    %14 = vector.broadcast %13 : vector<256x1xf32> to vector<256x32xf32>
    %15 = arith.mulf %7, %14 : vector<256x32xf32>
    %c0_9 = arith.constant 0 : index
    %c0_10 = arith.constant 0 : index
    %16 = vector.load %arg4[%c0_9, %c0_10] : memref<32x16xf32, #tpu.memory_space<vmem>>, vector<32x16xf32>
    %cst_11 = arith.constant dense<0.000000e+00> : vector<256x16xf32>
    %17 = tpu.matmul %15, %16, %cst_11 {dimension_numbers = #tpu.dot_dimension_numbers<[1], [0], [0], [1], [0, 0, 1, 1], [], []>} : vector<256x32xf32>, vector<32x16xf32>, vector<256x16xf32> -> vector<256x16xf32>
    %18 = math.exp %17 : vector<256x16xf32>
    %cst_12 = arith.constant dense<0.000000e+00> : vector<256xf32>
    %19 = vector.multi_reduction <add>, %18, %cst_12 [1] : vector<256x16xf32> to vector<256xf32>
    %20 = vector.shape_cast %19 : vector<256xf32> to vector<256x1xf32>
    %21 = vector.broadcast %20 : vector<256x1xf32> to vector<256x16xf32>
    %22 = arith.divf %18, %21 : vector<256x16xf32>
    %c0_13 = arith.constant 0 : index
    %c0_14 = arith.constant 0 : index
    %23 = vector.load %arg5[%c0_13, %c0_14] : memref<16x32xf32, #tpu.memory_space<vmem>>, vector<16x32xf32>
    %cst_15 = arith.constant dense<0.000000e+00> : vector<256x32xf32>
    %24 = tpu.matmul %22, %23, %cst_15 {dimension_numbers = #tpu.dot_dimension_numbers<[1], [0], [0], [1], [0, 0, 1, 1], [], []>} : vector<256x16xf32>, vector<16x32xf32>, vector<256x32xf32> -> vector<256x32xf32>
    %cst_16 = arith.constant dense<0.000000e+00> : vector<256xf32>
    %25 = vector.multi_reduction <add>, %24, %cst_16 [1] : vector<256x32xf32> to vector<256xf32>
    %26 = vector.shape_cast %25 : vector<256xf32> to vector<256x1xf32>
    %cst_17 = arith.constant 3.125000e-02 : f32
    %27 = vector.broadcast %cst_17 : f32 to vector<256x1xf32>
    %28 = arith.mulf %26, %27 : vector<256x1xf32>
    %29 = arith.mulf %24, %24 : vector<256x32xf32>
    %cst_18 = arith.constant dense<0.000000e+00> : vector<256xf32>
    %30 = vector.multi_reduction <add>, %29, %cst_18 [1] : vector<256x32xf32> to vector<256xf32>
    %31 = vector.shape_cast %30 : vector<256xf32> to vector<256x1xf32>
    %cst_19 = arith.constant 3.125000e-02 : f32
    %32 = vector.broadcast %cst_19 : f32 to vector<256x1xf32>
    %33 = arith.mulf %31, %32 : vector<256x1xf32>
    %34 = arith.mulf %28, %28 : vector<256x1xf32>
    %35 = arith.subf %33, %34 : vector<256x1xf32>
    %cst_20 = arith.constant 0.000000e+00 : f32
    %36 = vector.broadcast %cst_20 : f32 to vector<256x1xf32>
    %37 = arith.maximumf %35, %36 : vector<256x1xf32>
    %38 = vector.broadcast %28 : vector<256x1xf32> to vector<256x32xf32>
    %39 = arith.subf %24, %38 : vector<256x32xf32>
    %cst_21 = arith.constant 9.99999974E-6 : f32
    %40 = vector.broadcast %cst_21 : f32 to vector<256x1xf32>
    %41 = arith.addf %37, %40 : vector<256x1xf32>
    %42 = math.rsqrt %41 : vector<256x1xf32>
    %43 = vector.broadcast %42 : vector<256x1xf32> to vector<256x32xf32>
    %44 = arith.mulf %39, %43 : vector<256x32xf32>
    %45 = vector.broadcast %2 : vector<1x32xf32> to vector<256x32xf32>
    %46 = arith.mulf %44, %45 : vector<256x32xf32>
    %47 = vector.broadcast %3 : vector<1x32xf32> to vector<256x32xf32>
    %48 = arith.addf %46, %47 : vector<256x32xf32>
    %c0_22 = arith.constant 0 : index
    %c0_23 = arith.constant 0 : index
    %49 = vector.load %arg6[%c0_22, %c0_23] : memref<32x32xf32, #tpu.memory_space<vmem>>, vector<32x32xf32>
    %cst_24 = arith.constant dense<0.000000e+00> : vector<256x32xf32>
    %50 = tpu.matmul %48, %49, %cst_24 {dimension_numbers = #tpu.dot_dimension_numbers<[1], [0], [0], [1], [0, 0, 1, 1], [], []>} : vector<256x32xf32>, vector<32x32xf32>, vector<256x32xf32> -> vector<256x32xf32>
    %c0_25 = arith.constant 0 : index
    %c0_26 = arith.constant 0 : index
    %51 = vector.load %arg7[%c0_25, %c0_26] : memref<1x32xf32, #tpu.memory_space<vmem>>, vector<1x32xf32>
    %52 = vector.broadcast %51 : vector<1x32xf32> to vector<256x32xf32>
    %53 = arith.addf %50, %52 : vector<256x32xf32>
    %54 = arith.addf %53, %0 : vector<256x32xf32>
    %cst_27 = arith.constant 0.000000e+00 : f32
    %55 = vector.broadcast %cst_27 : f32 to vector<256x32xf32>
    %56 = arith.maximumf %54, %55 : vector<256x32xf32>
    %c0_28 = arith.constant 0 : index
    %c0_29 = arith.constant 0 : index
    %57 = vector.load %arg8[%c0_28, %c0_29] : memref<256x32xf32, #tpu.memory_space<vmem>>, vector<256x32xf32>
    tpu.vector_store %arg8[%c0_28, %c0_29], %56 {strides = array<i32>} : memref<256x32xf32, #tpu.memory_space<vmem>>, vector<256x32xf32>,
    return
  }
  func.func @transform_0(%arg0: i32) -> (i32, i32) {
    %c0_i32 = arith.constant 0 : i32
    %c0_i32_0 = arith.constant 0 : i32
    return %arg0, %c0_i32 : i32, i32
  }
  func.func @transform_1(%arg0: i32) -> (i32, i32) {
    %c0_i32 = arith.constant 0 : i32
    %c0_i32_0 = arith.constant 0 : i32
    %c0_i32_1 = arith.constant 0 : i32
    return %c0_i32, %c0_i32_0 : i32, i32
  }
  func.func @transform_2(%arg0: i32) -> (i32, i32) {
    %c0_i32 = arith.constant 0 : i32
    %c0_i32_0 = arith.constant 0 : i32
    %c0_i32_1 = arith.constant 0 : i32
    return %c0_i32, %c0_i32_0 : i32, i32
  }
  func.func @transform_3(%arg0: i32) -> (i32, i32) {
    %c0_i32 = arith.constant 0 : i32
    %c0_i32_0 = arith.constant 0 : i32
    %c0_i32_1 = arith.constant 0 : i32
    return %c0_i32, %c0_i32_0 : i32, i32
  }
  func.func @transform_4(%arg0: i32) -> (i32, i32) {
    %c0_i32 = arith.constant 0 : i32
    %c0_i32_0 = arith.constant 0 : i32
    %c0_i32_1 = arith.constant 0 : i32
    return %c0_i32, %c0_i32_0 : i32, i32
  }
  func.func @transform_5(%arg0: i32) -> (i32, i32) {
    %c0_i32 = arith.constant 0 : i32
    %c0_i32_0 = arith.constant 0 : i32
    %c0_i32_1 = arith.constant 0 : i32
    return %c0_i32, %c0_i32_0 : i32, i32
  }
  func.func @transform_6(%arg0: i32) -> (i32, i32) {
    %c0_i32 = arith.constant 0 : i32
    %c0_i32_0 = arith.constant 0 : i32
    %c0_i32_1 = arith.constant 0 : i32
    return %c0_i32, %c0_i32_0 : i32, i32
  }
  func.func @transform_7(%arg0: i32) -> (i32, i32) {
    %c0_i32 = arith.constant 0 : i32
    %c0_i32_0 = arith.constant 0 : i32
    return %arg0, %c0_i32 : i32, i32
  }
}

</mosaic_0001>

<llo_original>
// kernel: tpu_custom_call.1
$region0: #{tpu_custom_call.1}
  #allocation0 [shape = 'u32[]', space=smem, size = 0x4, offset = 0x4, fixed_abs, tag = 'smem constant byte address 0x4 - core index']
  #allocation1 [shape = 'u32[72,128]{1,0:T(1,128)}', space=vmem, size = 0x9000, scoped, tag = 'internal scratch']
  %s0 = inlined_call_operand.vmem [shape: f32[512,32], index: 0, kind: input, shape index: {}]
  %s1 = inlined_call_operand.vmem [shape: f32[32,32], index: 1, kind: input, shape index: {}]
  %s2 = inlined_call_operand.vmem [shape: f32[3,32], index: 2, kind: input, shape index: {}]
  %s3 = inlined_call_operand.vmem [shape: f32[32,16], index: 3, kind: input, shape index: {}]
  %s4 = inlined_call_operand.vmem [shape: f32[16,32], index: 4, kind: input, shape index: {}]
  %s5 = inlined_call_operand.vmem [shape: f32[32,32], index: 5, kind: input, shape index: {}]
  %s6 = inlined_call_operand.vmem [shape: f32[1,32], index: 6, kind: input, shape index: {}]
  %s7 = inlined_call_operand.vmem [shape: f32[512,32], index: 7, kind: output, shape index: {}]
  %s8 = sld [smem:[#allocation0]]
  $region61: #{tpu_custom_call.1} parent=0
    _
  %s10 = ssub.s32 1, %s8
  %s11 = scalar_select 0, %s10, %s8
  loop: start=0, step=1, limit=4
  $region2: #{tpu_custom_call.1} parent=0 // loop_pre_header
    _
  $region3: #{tpu_custom_call.1} parent=0 // loop_header
    %s13 = sphi 0, %s17
    %p14 = scmp.ge.s32.totalorder %s13, 4
    %s23 = sphi 0, %s25
    %s26 = sphi 0, %s23
    %s27 = sphi 0, %s26
    %s43 = sphi 0, %s27
    %s47 = sphi 0, %s47
    %s49 = sphi 0, %s47
    %s50 = sphi 0, %s49
    %s64 = sphi 0, %s50
    %s68 = sphi 0, %s68
    %s70 = sphi 0, %s68
    %s71 = sphi 0, %s70
    %s85 = sphi 0, %s71
    %s89 = sphi 0, %s89
    %s91 = sphi 0, %s89
    %s92 = sphi 0, %s91
    %s106 = sphi 0, %s92
    %s110 = sphi 0, %s110
    %s112 = sphi 0, %s110
    %s113 = sphi 0, %s112
    %s127 = sphi 0, %s113
    %s131 = sphi 0, %s131
    %s133 = sphi 0, %s131
    %s134 = sphi 0, %s133
    %s148 = sphi 0, %s134
    %s152 = sphi 0, %s152
    %s154 = sphi 0, %s152
    %s155 = sphi 0, %s154
    %s169 = sphi 0, %s155
    %s175 = sphi 0, %s177
    %s178 = sphi 0, %s175
    %s179 = sphi 0, %s178
    %s195 = sphi 0, %s179
  $region4: #{tpu_custom_call.1} parent=0 // loop_header_branch
    %16 = sbr.rel (%p14) target = $region8
  $region5: #{tpu_custom_call.1} parent=0 // loop_body
    %s18 = ssub.s32 %s13, 1
    %s19 = ssub.s32 %s13, 2
    %s20 = sadd.s32 %s13, 1
    %s21 = ssub.s32 %s13, %s20
    %p22 = scmp.eq.s32.totalorder %s21, 0
    %s24 = sadd.s32 %s23, 1
    %s25 = scalar_select %p22, %s23, %s24
    %p28 = pneg %p22
    %p29 = scmp.eq.s32.totalorder %s13, 1
    %p30 = por %p28, %p29
    %p31 = scmp.ne.s32.totalorder %s23, %s26
    %p32 = scmp.eq.s32.totalorder %s13, 0
    %p33 = por %p31, %p32
    %p34 = scmp.ne.s32.totalorder %s23, %s26
    %p35 = scmp.eq.s32.totalorder %s18, 1
    %p36 = por %p34, %p35
    %p37 = scmp.ne.s32.totalorder %s26, %s27
    %p38 = scmp.eq.s32.totalorder %s18, 0
    %p39 = por %p37, %p38
    %p40 = scmp.ne.s32.totalorder %s26, %s27
    %p41 = scmp.eq.s32.totalorder %s19, 1
    %p42 = por %p40, %p41
    %p44 = scmp.ne.s32.totalorder %s27, %s43
    %p45 = scmp.eq.s32.totalorder %s19, 0
    %p46 = por %p44, %p45
    %s48 = sadd.s32 %s47, 1
    %p51 = scmp.eq.s32.totalorder %s13, 1
    %p52 = scmp.ne.s32.totalorder %s47, %s49
    %p53 = scmp.eq.s32.totalorder %s13, 0
    %p54 = por %p52, %p53
    %p55 = scmp.ne.s32.totalorder %s47, %s49
    %p56 = scmp.eq.s32.totalorder %s18, 1
    %p57 = por %p55, %p56
    %p58 = scmp.ne.s32.totalorder %s49, %s50
    %p59 = scmp.eq.s32.totalorder %s18, 0
    %p60 = por %p58, %p59
    %p61 = scmp.ne.s32.totalorder %s49, %s50
    %p62 = scmp.eq.s32.totalorder %s19, 1
    %p63 = por %p61, %p62
    %p65 = scmp.ne.s32.totalorder %s50, %s64
    %p66 = scmp.eq.s32.totalorder %s19, 0
    %p67 = por %p65, %p66
    %s69 = sadd.s32 %s68, 1
    %p72 = scmp.eq.s32.totalorder %s13, 1
    %p73 = scmp.ne.s32.totalorder %s68, %s70
    %p74 = scmp.eq.s32.totalorder %s13, 0
    %p75 = por %p73, %p74
    %p76 = scmp.ne.s32.totalorder %s68, %s70
    %p77 = scmp.eq.s32.totalorder %s18, 1
    %p78 = por %p76, %p77
    %p79 = scmp.ne.s32.totalorder %s70, %s71
    %p80 = scmp.eq.s32.totalorder %s18, 0
    %p81 = por %p79, %p80
    %p82 = scmp.ne.s32.totalorder %s70, %s71
    %p83 = scmp.eq.s32.totalorder %s19, 1
    %p84 = por %p82, %p83
    %p86 = scmp.ne.s32.totalorder %s71, %s85
    %p87 = scmp.eq.s32.totalorder %s19, 0
    %p88 = por %p86, %p87
    %s90 = sadd.s32 %s89, 1
    %p93 = scmp.eq.s32.totalorder %s13, 1
    %p94 = scmp.ne.s32.totalorder %s89, %s91
    %p95 = scmp.eq.s32.totalorder %s13, 0
    %p96 = por %p94, %p95
    %p97 = scmp.ne.s32.totalorder %s89, %s91
    %p98 = scmp.eq.s32.totalorder %s18, 1
    %p99 = por %p97, %p98
    %p100 = scmp.ne.s32.totalorder %s91, %s92
    %p101 = scmp.eq.s32.totalorder %s18, 0
    %p102 = por %p100, %p101
    %p103 = scmp.ne.s32.totalorder %s91, %s92
    %p104 = scmp.eq.s32.totalorder %s19, 1
    %p105 = por %p103, %p104
    %p107 = scmp.ne.s32.totalorder %s92, %s106
    %p108 = scmp.eq.s32.totalorder %s19, 0
    %p109 = por %p107, %p108
    %s111 = sadd.s32 %s110, 1
    %p114 = scmp.eq.s32.totalorder %s13, 1
    %p115 = scmp.ne.s32.totalorder %s110, %s112
    %p116 = scmp.eq.s32.totalorder %s13, 0
    %p117 = por %p115, %p116
    %p118 = scmp.ne.s32.totalorder %s110, %s112
    %p119 = scmp.eq.s32.totalorder %s18, 1
    %p120 = por %p118, %p119
    %p121 = scmp.ne.s32.totalorder %s112, %s113
    %p122 = scmp.eq.s32.totalorder %s18, 0
    %p123 = por %p121, %p122
    %p124 = scmp.ne.s32.totalorder %s112, %s113
    %p125 = scmp.eq.s32.totalorder %s19, 1
    %p126 = por %p124, %p125
    %p128 = scmp.ne.s32.totalorder %s113, %s127
    %p129 = scmp.eq.s32.totalorder %s19, 0
    %p130 = por %p128, %p129
    %s132 = sadd.s32 %s131, 1
    %p135 = scmp.eq.s32.totalorder %s13, 1
    %p136 = scmp.ne.s32.totalorder %s131, %s133
    %p137 = scmp.eq.s32.totalorder %s13, 0
    %p138 = por %p136, %p137
    %p139 = scmp.ne.s32.totalorder %s131, %s133
    %p140 = scmp.eq.s32.totalorder %s18, 1
    %p141 = por %p139, %p140
    %p142 = scmp.ne.s32.totalorder %s133, %s134
    %p143 = scmp.eq.s32.totalorder %s18, 0
    %p144 = por %p142, %p143
    %p145 = scmp.ne.s32.totalorder %s133, %s134
    %p146 = scmp.eq.s32.totalorder %s19, 1
    %p147 = por %p145, %p146
    %p149 = scmp.ne.s32.totalorder %s134, %s148
    %p150 = scmp.eq.s32.totalorder %s19, 0
    %p151 = por %p149, %p150
    %s153 = sadd.s32 %s152, 1
    %p156 = scmp.eq.s32.totalorder %s13, 1
    %p157 = scmp.ne.s32.totalorder %s152, %s154
    %p158 = scmp.eq.s32.totalorder %s13, 0
    %p159 = por %p157, %p158
    %p160 = scmp.ne.s32.totalorder %s152, %s154
    %p161 = scmp.eq.s32.totalorder %s18, 1
    %p162 = por %p160, %p161
    %p163 = scmp.ne.s32.totalorder %s154, %s155
    %p164 = scmp.eq.s32.totalorder %s18, 0
    %p165 = por %p163, %p164
    %p166 = scmp.ne.s32.totalorder %s154, %s155
    %p167 = scmp.eq.s32.totalorder %s19, 1
    %p168 = por %p166, %p167
    %p170 = scmp.ne.s32.totalorder %s155, %s169
    %p171 = scmp.eq.s32.totalorder %s19, 0
    %p172 = por %p170, %p171
    %s173 = ssub.s32 %s13, %s20
    %p174 = scmp.eq.s32.totalorder %s173, 0
    %s176 = sadd.s32 %s175, 1
    %s177 = scalar_select %p174, %s175, %s176
    %p180 = pneg %p174
    %p181 = scmp.eq.s32.totalorder %s13, 1
    %p182 = por %p180, %p181
    %p183 = scmp.ne.s32.totalorder %s175, %s178
    %p184 = scmp.eq.s32.totalorder %s13, 0
    %p185 = por %p183, %p184
    %p186 = scmp.ne.s32.totalorder %s175, %s178
    %p187 = scmp.eq.s32.totalorder %s18, 1
    %p188 = por %p186, %p187
    %p189 = scmp.ne.s32.totalorder %s178, %s179
    %p190 = scmp.eq.s32.totalorder %s18, 0
    %p191 = por %p189, %p190
    %p192 = scmp.ne.s32.totalorder %s178, %s179
    %p193 = scmp.eq.s32.totalorder %s19, 1
    %p194 = por %p192, %p193
    %p196 = scmp.ne.s32.totalorder %s179, %s195
    %p197 = scmp.eq.s32.totalorder %s19, 0
    %p198 = por %p196, %p197
    %p199 = scmp.le.s32.totalorder 1, %s13
    %p200 = scmp.lt.s32.totalorder %s13, 3
    %p201 = pnand %p199, %p200
    %p202 = pneg %p201
    // Predicated region
    $region9: #{tpu_custom_call.1} parent=5 // pred_check
      _
    $region10: #{tpu_custom_call.1} parent=5 // pred_check_branch
      %204 = sbr.rel (%p201) target = $region12
    $region11: #{tpu_custom_call.1} parent=5 // pred_region
      %s205 = ssub.s32 %s13, 1
      // Predicated region
      $region13: #{tpu_custom_call.1} parent=11 // pred_check
        %p206 = pneg %p60
      $region14: #{tpu_custom_call.1} parent=11 // pred_check_branch
        %208 = sbr.rel (%p206) target = $region16
      $region15: #{tpu_custom_call.1} parent=11 // pred_region
        _
      $region16: #{tpu_custom_call.1} parent=11 // pred_fallthru
        _
      // Predicated region
      $region17: #{tpu_custom_call.1} parent=11 // pred_check
        %p209 = pneg %p81
      $region18: #{tpu_custom_call.1} parent=11 // pred_check_branch
        %211 = sbr.rel (%p209) target = $region20
      $region19: #{tpu_custom_call.1} parent=11 // pred_region
        _
      $region20: #{tpu_custom_call.1} parent=11 // pred_fallthru
        _
      // Predicated region
      $region21: #{tpu_custom_call.1} parent=11 // pred_check
        %p212 = pneg %p102
      $region22: #{tpu_custom_call.1} parent=11 // pred_check_branch
        %214 = sbr.rel (%p212) target = $region24
      $region23: #{tpu_custom_call.1} parent=11 // pred_region
        _
      $region24: #{tpu_custom_call.1} parent=11 // pred_fallthru
        _
      // Predicated region
      $region25: #{tpu_custom_call.1} parent=11 // pred_check
        %p215 = pneg %p123
      $region26: #{tpu_custom_call.1} parent=11 // pred_check_branch
        %217 = sbr.rel (%p215) target = $region28
      $region27: #{tpu_custom_call.1} parent=11 // pred_region
        _
      $region28: #{tpu_custom_call.1} parent=11 // pred_fallthru
        _
      // Predicated region
      $region29: #{tpu_custom_call.1} parent=11 // pred_check
        %p218 = pneg %p144
      $region30: #{tpu_custom_call.1} parent=11 // pred_check_branch
        %220 = sbr.rel (%p218) target = $region32
      $region31: #{tpu_custom_call.1} parent=11 // pred_region
        _
      $region32: #{tpu_custom_call.1} parent=11 // pred_fallthru
        _
      // Predicated region
      $region33: #{tpu_custom_call.1} parent=11 // pred_check
        %p221 = pneg %p165
      $region34: #{tpu_custom_call.1} parent=11 // pred_check_branch
        %223 = sbr.rel (%p221) target = $region36
      $region35: #{tpu_custom_call.1} parent=11 // pred_region
        _
      $region36: #{tpu_custom_call.1} parent=11 // pred_fallthru
        _
    $region12: #{tpu_custom_call.1} parent=5 // pred_fallthru
      _
    %p224 = scmp.lt.s32.totalorder %s13, 2
    // Predicated region
    $region37: #{tpu_custom_call.1} parent=5 // pred_check
      %p225 = pneg %p224
    $region38: #{tpu_custom_call.1} parent=5 // pred_check_branch
      %227 = sbr.rel (%p225) target = $region40
    $region39: #{tpu_custom_call.1} parent=5 // pred_region
      // Predicated region
      $region41: #{tpu_custom_call.1} parent=39 // pred_check
        %p228 = pneg %p33
      $region42: #{tpu_custom_call.1} parent=39 // pred_check_branch
        %230 = sbr.rel (%p228) target = $region44
      $region43: #{tpu_custom_call.1} parent=39 // pred_region
        %s231 = smul.u32 32, %s13
        %p232 = scmp.lt.s32.totalorder %s231, 63
        %s233 = scalar_select %p232, %s231, 63
        %s234 = smul.addr %s233, 8
        %s235 = scalar_lea.vmem %s0, %s234
        %s236 = smul.u32 32, %s13
      $region44: #{tpu_custom_call.1} parent=39 // pred_fallthru
        _
    $region40: #{tpu_custom_call.1} parent=5 // pred_fallthru
      _
    %p237 = scmp.le.s32.totalorder 1, %s13
    %p238 = scmp.lt.s32.totalorder %s13, 3
    %p239 = pnand %p237, %p238
    %p240 = pneg %p239
    // Predicated region
    $region45: #{tpu_custom_call.1} parent=5 // pred_check
      _
    $region46: #{tpu_custom_call.1} parent=5 // pred_check_branch
      %242 = sbr.rel (%p239) target = $region48
    $region47: #{tpu_custom_call.1} parent=5 // pred_region
      %s243 = ssub.s32 %s13, 1
      %s244 = smul.u32 32, %s18
      %p245 = scmp.lt.s32.totalorder %s244, 63
      %s246 = scalar_select %p245, %s244, 63
      %s247 = smul.addr %s246, 8
      %s248 = scalar_lea.vmem %s0, %s247
      %p249 = pneg %p39
      %p250 = pneg %p36
      %p251 = pneg %p60
      %p252 = pneg %p57
      %p253 = pneg %p81
      %p254 = pneg %p78
      %p255 = pneg %p102
      %p256 = pneg %p99
      %p257 = pneg %p123
      %p258 = pneg %p120
      %p259 = pneg %p144
      %p260 = pneg %p141
      %p261 = pneg %p165
      %p262 = pneg %p162
      %p263 = pneg %p191
      %p264 = pneg %p188
      %s265 = smul.u32 32, %s18
      %p266 = scmp.lt.s32.totalorder %s265, 63
      %s267 = scalar_select %p266, %s265, 63
      %s268 = smul.addr %s267, 8
      %s269 = scalar_lea.vmem %s7, %s268
      %s270 = smul.u32 32, %s18
      %p271 = scmp.lt.s32.totalorder %s270, 63
      %s272 = scalar_select %p271, %s270, 63
      %s273 = smul.addr %s272, 8
      %s274 = scalar_lea.vmem %s0, %s273
      %s275 = smul.u32 32, %s18
      %s276 = smul.u32 32, %s18
      %p277 = scmp.lt.s32.totalorder %s276, 63
      %s278 = scalar_select %p277, %s276, 63
      %s279 = smul.addr %s278, 8
      %s280 = scalar_lea.vmem %s7, %s279
      %s281 = smul.u32 32, %s18
      %v282 = vld [vmem:[%s274] sm:$0xff]
      %v283 = vld [vmem:[%s274 + $0x8] sm:$0xff]
      %v284 = vld [vmem:[%s274 + $0x10] sm:$0xff]
      %v285 = vld [vmem:[%s274 + $0x18] sm:$0xff]
      %v286 = vld [vmem:[%s274 + $0x20] sm:$0xff]
      %v287 = vld [vmem:[%s274 + $0x28] sm:$0xff]
      %v288 = vld [vmem:[%s274 + $0x30] sm:$0xff]
      %v289 = vld [vmem:[%s274 + $0x38] sm:$0xff]
      %v290 = vld [vmem:[%s274 + $0x40] sm:$0xff]
      %v291 = vld [vmem:[%s274 + $0x48] sm:$0xff]
      %v292 = vld [vmem:[%s274 + $0x50] sm:$0xff]
      %v293 = vld [vmem:[%s274 + $0x58] sm:$0xff]
      %v294 = vld [vmem:[%s274 + $0x60] sm:$0xff]
      %v295 = vld [vmem:[%s274 + $0x68] sm:$0xff]
      %v296 = vld [vmem:[%s274 + $0x70] sm:$0xff]
      %v297 = vld [vmem:[%s274 + $0x78] sm:$0xff]
      %v298 = vld [vmem:[%s274 + $0x80] sm:$0xff]
      %v299 = vld [vmem:[%s274 + $0x88] sm:$0xff]
      %v300 = vld [vmem:[%s274 + $0x90] sm:$0xff]
      %v301 = vld [vmem:[%s274 + $0x98] sm:$0xff]
      %v302 = vld [vmem:[%s274 + $0xa0] sm:$0xff]
      %v303 = vld [vmem:[%s274 + $0xa8] sm:$0xff]
      %v304 = vld [vmem:[%s274 + $0xb0] sm:$0xff]
      %v305 = vld [vmem:[%s274 + $0xb8] sm:$0xff]
      %v306 = vld [vmem:[%s274 + $0xc0] sm:$0xff]
      %v307 = vld [vmem:[%s274 + $0xc8] sm:$0xff]
      %v308 = vld [vmem:[%s274 + $0xd0] sm:$0xff]
      %v309 = vld [vmem:[%s274 + $0xd8] sm:$0xff]
      %v310 = vld [vmem:[%s274 + $0xe0] sm:$0xff]
      %v311 = vld [vmem:[%s274 + $0xe8] sm:$0xff]
      %v312 = vld [vmem:[%s274 + $0xf0] sm:$0xff]
      %v313 = vld [vmem:[%s274 + $0xf8] sm:$0xff]
      %v314 = vld [vmem:[%s2] sm:$0x1]
      %v315 = vld [vmem:[%s2 + $0x1] sm:$0x1]
      %v316 = vld [vmem:[%s2 + $0x2] sm:$0x1]
      %v317 = vld [vmem:[%s1] sm:$0xff]
      %v318 = vld [vmem:[%s1 + $0x8] sm:$0xff]
      %v319 = vld [vmem:[%s1 + $0x10] sm:$0xff]
      %v320 = vld [vmem:[%s1 + $0x18] sm:$0xff]
      %v321 = vperm.slane %v314, 0
      %vm322 = vcmask 261120
      %v324 = vsel %vm322, %v282, 0
      %v327 = vsel %vm322, %v283, 0
      %v330 = vsel %vm322, %v284, 0
      %v333 = vsel %vm322, %v285, 0
      %v336 = vsel %vm322, %v286, 0
      %v339 = vsel %vm322, %v287, 0
      %v342 = vsel %vm322, %v288, 0
      %v345 = vsel %vm322, %v289, 0
      %v348 = vsel %vm322, %v290, 0
      %v351 = vsel %vm322, %v291, 0
      %v354 = vsel %vm322, %v292, 0
      %v357 = vsel %vm322, %v293, 0
      %v360 = vsel %vm322, %v294, 0
      %v363 = vsel %vm322, %v295, 0
      %v366 = vsel %vm322, %v296, 0
      %v369 = vsel %vm322, %v297, 0
      %v372 = vsel %vm322, %v298, 0
      %v375 = vsel %vm322, %v299, 0
      %v378 = vsel %vm322, %v300, 0
      %v381 = vsel %vm322, %v301, 0
      %v384 = vsel %vm322, %v302, 0
      %v387 = vsel %vm322, %v303, 0
      %v390 = vsel %vm322, %v304, 0
      %v393 = vsel %vm322, %v305, 0
      %v396 = vsel %vm322, %v306, 0
      %v399 = vsel %vm322, %v307, 0
      %v402 = vsel %vm322, %v308, 0
      %v405 = vsel %vm322, %v309, 0
      %v408 = vsel %vm322, %v310, 0
      %v411 = vsel %vm322, %v311, 0
      %v414 = vsel %vm322, %v312, 0
      %v417 = vsel %vm322, %v313, 0
      %419 = vmatpush.msra.mxu0 0.0
      %420 = vmatpush.msra.mxu0 0.0
      %421 = vmatpush.msra.mxu0 0.0
      %422 = vmatpush.msra.mxu0 0.0
      %423 = vmatpush.msra.mxu0 0.0
      %424 = vmatpush.msra.mxu0 0.0
      %425 = vmatpush.msra.mxu0 0.0
      %426 = vmatpush.msra.mxu0 0.0
      %427 = vmatpush.msra.mxu0 0.0
      %428 = vmatpush.msra.mxu0 0.0
      %429 = vmatpush.msra.mxu0 0.0
      %430 = vmatpush.msra.mxu0 0.0
      %431 = vmatpush.msra.mxu0 %v320
      %432 = vmatpush.msra.mxu0 %v319
      %433 = vmatpush.msra.mxu0 %v318
      %434 = vmatpush.msra.mxu0 %v317
      %435 = vmatmul.f32.gmra.mxu0 %v324
      %v436 = vpop.f32.mrf.mxu0
      %v437 = vadd.f32 %v321, %v436
      %438 = vmatmul.f32.gmra.mxu0 %v327
      %v439 = vpop.f32.mrf.mxu0
      %v440 = vadd.f32 %v321, %v439
      %441 = vmatmul.f32.gmra.mxu0 %v330
      %v442 = vpop.f32.mrf.mxu0
      %v443 = vadd.f32 %v321, %v442
      %444 = vmatmul.f32.gmra.mxu0 %v333
      %v445 = vpop.f32.mrf.mxu0
      %v446 = vadd.f32 %v321, %v445
      %447 = vmatmul.f32.gmra.mxu0 %v336
      %v448 = vpop.f32.mrf.mxu0
      %v449 = vadd.f32 %v321, %v448
      %450 = vmatmul.f32.gmra.mxu0 %v339
      %v451 = vpop.f32.mrf.mxu0
      %v452 = vadd.f32 %v321, %v451
      %453 = vmatmul.f32.gmra.mxu0 %v342
      %v454 = vpop.f32.mrf.mxu0
      %v455 = vadd.f32 %v321, %v454
      %456 = vmatmul.f32.gmra.mxu0 %v345
      %v457 = vpop.f32.mrf.mxu0
      %v458 = vadd.f32 %v321, %v457
      %459 = vmatmul.f32.gmra.mxu0 %v348
      %v460 = vpop.f32.mrf.mxu0
      %v461 = vadd.f32 %v321, %v460
      %462 = vmatmul.f32.gmra.mxu0 %v351
      %v463 = vpop.f32.mrf.mxu0
      %v464 = vadd.f32 %v321, %v463
      %465 = vmatmul.f32.gmra.mxu0 %v354
      %v466 = vpop.f32.mrf.mxu0
      %v467 = vadd.f32 %v321, %v466
      %468 = vmatmul.f32.gmra.mxu0 %v357
      %v469 = vpop.f32.mrf.mxu0
      %v470 = vadd.f32 %v321, %v469
      %471 = vmatmul.f32.gmra.mxu0 %v360
      %v472 = vpop.f32.mrf.mxu0
      %v473 = vadd.f32 %v321, %v472
      %474 = vmatmul.f32.gmra.mxu0 %v363
      %v475 = vpop.f32.mrf.mxu0
      %v476 = vadd.f32 %v321, %v475
      %477 = vmatmul.f32.gmra.mxu0 %v366
      %v478 = vpop.f32.mrf.mxu0
      %v479 = vadd.f32 %v321, %v478
      %480 = vmatmul.f32.gmra.mxu0 %v369
      %v481 = vpop.f32.mrf.mxu0
      %v482 = vadd.f32 %v321, %v481
      %483 = vmatmul.f32.gmra.mxu0 %v372
      %v484 = vpop.f32.mrf.mxu0
      %v485 = vadd.f32 %v321, %v484
      %486 = vmatmul.f32.gmra.mxu0 %v375
      %v487 = vpop.f32.mrf.mxu0
      %v488 = vadd.f32 %v321, %v487
      %489 = vmatmul.f32.gmra.mxu0 %v378
      %v490 = vpop.f32.mrf.mxu0
      %v491 = vadd.f32 %v321, %v490
      %492 = vmatmul.f32.gmra.mxu0 %v381
      %v493 = vpop.f32.mrf.mxu0
      %v494 = vadd.f32 %v321, %v493
      %495 = vmatmul.f32.gmra.mxu0 %v384
      %v496 = vpop.f32.mrf.mxu0
      %v497 = vadd.f32 %v321, %v496
      %498 = vmatmul.f32.gmra.mxu0 %v387
      %v499 = vpop.f32.mrf.mxu0
      %v500 = vadd.f32 %v321, %v499
      %501 = vmatmul.f32.gmra.mxu0 %v390
      %v502 = vpop.f32.mrf.mxu0
      %v503 = vadd.f32 %v321, %v502
      %504 = vmatmul.f32.gmra.mxu0 %v393
      %v505 = vpop.f32.mrf.mxu0
      %v506 = vadd.f32 %v321, %v505
      %507 = vmatmul.f32.gmra.mxu0 %v396
      %v508 = vpop.f32.mrf.mxu0
      %v509 = vadd.f32 %v321, %v508
      %510 = vmatmul.f32.gmra.mxu0 %v399
      %v511 = vpop.f32.mrf.mxu0
      %v512 = vadd.f32 %v321, %v511
      %513 = vmatmul.f32.gmra.mxu0 %v402
      %v514 = vpop.f32.mrf.mxu0
      %v515 = vadd.f32 %v321, %v514
      %516 = vmatmul.f32.gmra.mxu0 %v405
      %v517 = vpop.f32.mrf.mxu0
      %v518 = vadd.f32 %v321, %v517
      %519 = vmatmul.f32.gmra.mxu0 %v408
      %v520 = vpop.f32.mrf.mxu0
      %v521 = vadd.f32 %v321, %v520
      %522 = vmatmul.f32.gmra.mxu0 %v411
      %v523 = vpop.f32.mrf.mxu0
      %v524 = vadd.f32 %v321, %v523
      %525 = vmatmul.f32.gmra.mxu0 %v414
      %v526 = vpop.f32.mrf.mxu0
      %v527 = vadd.f32 %v321, %v526
      %528 = vmatmul.f32.gmra.mxu0 %v417
      %v529 = vpop.f32.mrf.mxu0
      %v530 = vadd.f32 %v321, %v529
      %531 = vdwg.mxu0
      %v532 = vmul.f32 %v437, %v437
      %v533 = vmul.f32 %v440, %v440
      %v534 = vmul.f32 %v443, %v443
      %v535 = vmul.f32 %v446, %v446
      %v536 = vmul.f32 %v449, %v449
      %v537 = vmul.f32 %v452, %v452
      %v538 = vmul.f32 %v455, %v455
      %v539 = vmul.f32 %v458, %v458
      %v540 = vmul.f32 %v461, %v461
      %v541 = vmul.f32 %v464, %v464
      %v542 = vmul.f32 %v467, %v467
      %v543 = vmul.f32 %v470, %v470
      %v544 = vmul.f32 %v473, %v473
      %v545 = vmul.f32 %v476, %v476
      %v546 = vmul.f32 %v479, %v479
      %v547 = vmul.f32 %v482, %v482
      %v548 = vmul.f32 %v485, %v485
      %v549 = vmul.f32 %v488, %v488
      %v550 = vmul.f32 %v491, %v491
      %v551 = vmul.f32 %v494, %v494
      %v552 = vmul.f32 %v497, %v497
      %v553 = vmul.f32 %v500, %v500
      %v554 = vmul.f32 %v503, %v503
      %v555 = vmul.f32 %v506, %v506
      %v556 = vmul.f32 %v509, %v509
      %v557 = vmul.f32 %v512, %v512
      %v558 = vmul.f32 %v515, %v515
      %v559 = vmul.f32 %v518, %v518
      %v560 = vmul.f32 %v521, %v521
      %v561 = vmul.f32 %v524, %v524
      %v562 = vmul.f32 %v527, %v527
      %v563 = vmul.f32 %v530, %v530
      %v564 = vsel %vm322, %v532, 0.0
      %565 = vadd.xlane.f32.xlu0 %v564
      %v566 = vpop.xlane.xlu0 %565
      %v567 = vsel %vm322, %v533, 0.0
      %568 = vadd.xlane.f32.xlu0 %v567
      %v569 = vpop.xlane.xlu0 %568
      %v570 = vsel %vm322, %v534, 0.0
      %571 = vadd.xlane.f32.xlu0 %v570
      %v572 = vpop.xlane.xlu0 %571
      %v573 = vsel %vm322, %v535, 0.0
      %574 = vadd.xlane.f32.xlu0 %v573
      %v575 = vpop.xlane.xlu0 %574
      %v576 = vsel %vm322, %v536, 0.0
      %577 = vadd.xlane.f32.xlu0 %v576
      %v578 = vpop.xlane.xlu0 %577
      %v579 = vsel %vm322, %v537, 0.0
      %580 = vadd.xlane.f32.xlu0 %v579
      %v581 = vpop.xlane.xlu0 %580
      %v582 = vsel %vm322, %v538, 0.0
      %583 = vadd.xlane.f32.xlu0 %v582
      %v584 = vpop.xlane.xlu0 %583
      %v585 = vsel %vm322, %v539, 0.0
      %586 = vadd.xlane.f32.xlu0 %v585
      %v587 = vpop.xlane.xlu0 %586
      %v588 = vsel %vm322, %v540, 0.0
      %589 = vadd.xlane.f32.xlu0 %v588
      %v590 = vpop.xlane.xlu0 %589
      %v591 = vsel %vm322, %v541, 0.0
      %592 = vadd.xlane.f32.xlu0 %v591
      %v593 = vpop.xlane.xlu0 %592
      %v594 = vsel %vm322, %v542, 0.0
      %595 = vadd.xlane.f32.xlu0 %v594
      %v596 = vpop.xlane.xlu0 %595
      %v597 = vsel %vm322, %v543, 0.0
      %598 = vadd.xlane.f32.xlu0 %v597
      %v599 = vpop.xlane.xlu0 %598
      %v600 = vsel %vm322, %v544, 0.0
      %601 = vadd.xlane.f32.xlu0 %v600
      %v602 = vpop.xlane.xlu0 %601
      %v603 = vsel %vm322, %v545, 0.0
      %604 = vadd.xlane.f32.xlu0 %v603
      %v605 = vpop.xlane.xlu0 %604
      %v606 = vsel %vm322, %v546, 0.0
      %607 = vadd.xlane.f32.xlu0 %v606
      %v608 = vpop.xlane.xlu0 %607
      %v609 = vsel %vm322, %v547, 0.0
      %610 = vadd.xlane.f32.xlu0 %v609
      %v611 = vpop.xlane.xlu0 %610
      %v612 = vsel %vm322, %v548, 0.0
      %613 = vadd.xlane.f32.xlu0 %v612
      %v614 = vpop.xlane.xlu0 %613
      %v615 = vsel %vm322, %v549, 0.0
      %616 = vadd.xlane.f32.xlu0 %v615
      %v617 = vpop.xlane.xlu0 %616
      %v618 = vsel %vm322, %v550, 0.0
      %619 = vadd.xlane.f32.xlu0 %v618
      %v620 = vpop.xlane.xlu0 %619
      %v621 = vsel %vm322, %v551, 0.0
      %622 = vadd.xlane.f32.xlu0 %v621
      %v623 = vpop.xlane.xlu0 %622
      %v624 = vsel %vm322, %v552, 0.0
      %625 = vadd.xlane.f32.xlu0 %v624
      %v626 = vpop.xlane.xlu0 %625
      %v627 = vsel %vm322, %v553, 0.0
      %628 = vadd.xlane.f32.xlu0 %v627
      %v629 = vpop.xlane.xlu0 %628
      %v630 = vsel %vm322, %v554, 0.0
      %631 = vadd.xlane.f32.xlu0 %v630
      %v632 = vpop.xlane.xlu0 %631
      %v633 = vsel %vm322, %v555, 0.0
      %634 = vadd.xlane.f32.xlu0 %v633
      %v635 = vpop.xlane.xlu0 %634
      %v636 = vsel %vm322, %v556, 0.0
      %637 = vadd.xlane.f32.xlu0 %v636
      %v638 = vpop.xlane.xlu0 %637
      %v639 = vsel %vm322, %v557, 0.0
      %640 = vadd.xlane.f32.xlu0 %v639
      %v641 = vpop.xlane.xlu0 %640
      %v642 = vsel %vm322, %v558, 0.0
      %643 = vadd.xlane.f32.xlu0 %v642
      %v644 = vpop.xlane.xlu0 %643
      %v645 = vsel %vm322, %v559, 0.0
      %646 = vadd.xlane.f32.xlu0 %v645
      %v647 = vpop.xlane.xlu0 %646
      %v648 = vsel %vm322, %v560, 0.0
      %649 = vadd.xlane.f32.xlu0 %v648
      %v650 = vpop.xlane.xlu0 %649
      %v651 = vsel %vm322, %v561, 0.0
      %652 = vadd.xlane.f32.xlu0 %v651
      %v653 = vpop.xlane.xlu0 %652
      %v654 = vsel %vm322, %v562, 0.0
      %655 = vadd.xlane.f32.xlu0 %v654
      %v656 = vpop.xlane.xlu0 %655
      %v657 = vsel %vm322, %v563, 0.0
      %658 = vadd.xlane.f32.xlu0 %v657
      %v659 = vpop.xlane.xlu0 %658
      %v660 = vmax.f32 %v566, 1e-24
      %v661 = vmax.f32 %v569, 1e-24
      %v662 = vmax.f32 %v572, 1e-24
      %v663 = vmax.f32 %v575, 1e-24
      %v664 = vmax.f32 %v578, 1e-24
      %v665 = vmax.f32 %v581, 1e-24
      %v666 = vmax.f32 %v584, 1e-24
      %v667 = vmax.f32 %v587, 1e-24
      %v668 = vmax.f32 %v590, 1e-24
      %v669 = vmax.f32 %v593, 1e-24
      %v670 = vmax.f32 %v596, 1e-24
      %v671 = vmax.f32 %v599, 1e-24
      %v672 = vmax.f32 %v602, 1e-24
      %v673 = vmax.f32 %v605, 1e-24
      %v674 = vmax.f32 %v608, 1e-24
      %v675 = vmax.f32 %v611, 1e-24
      %v676 = vmax.f32 %v614, 1e-24
      %v677 = vmax.f32 %v617, 1e-24
      %v678 = vmax.f32 %v620, 1e-24
      %v679 = vmax.f32 %v623, 1e-24
      %v680 = vmax.f32 %v626, 1e-24
      %v681 = vmax.f32 %v629, 1e-24
      %v682 = vmax.f32 %v632, 1e-24
      %v683 = vmax.f32 %v635, 1e-24
      %v684 = vmax.f32 %v638, 1e-24
      %v685 = vmax.f32 %v641, 1e-24
      %v686 = vmax.f32 %v644, 1e-24
      %v687 = vmax.f32 %v647, 1e-24
      %v688 = vmax.f32 %v650, 1e-24
      %v689 = vmax.f32 %v653, 1e-24
      %v690 = vmax.f32 %v656, 1e-24
      %v691 = vmax.f32 %v659, 1e-24
      %v692 = vrsqrt.pop %v660
      %v693 = vmul.f32 %v692, %v660
      %v694 = vmul.f32 %v693, %v692
      %v695 = vmul.f32 0.5, %v694
      %v696 = vsub.f32 1.5, %v695
      %v697 = vmul.f32 %v692, %v696
      %vm698 = vweird.f32 %v660
      %vm699 = vweird.f32 %v692
      %vm700 = vmor %vm698, %vm699
      %v701 = vsel %vm700, %v692, %v697
      %v702 = vrsqrt.pop %v661
      %v703 = vmul.f32 %v702, %v661
      %v704 = vmul.f32 %v703, %v702
      %v705 = vmul.f32 0.5, %v704
      %v706 = vsub.f32 1.5, %v705
      %v707 = vmul.f32 %v702, %v706
      %vm708 = vweird.f32 %v661
      %vm709 = vweird.f32 %v702
      %vm710 = vmor %vm708, %vm709
      %v711 = vsel %vm710, %v702, %v707
      %v712 = vrsqrt.pop %v662
      %v713 = vmul.f32 %v712, %v662
      %v714 = vmul.f32 %v713, %v712
      %v715 = vmul.f32 0.5, %v714
      %v716 = vsub.f32 1.5, %v715
      %v717 = vmul.f32 %v712, %v716
      %vm718 = vweird.f32 %v662
      %vm719 = vweird.f32 %v712
      %vm720 = vmor %vm718, %vm719
      %v721 = vsel %vm720, %v712, %v717
      %v722 = vrsqrt.pop %v663
      %v723 = vmul.f32 %v722, %v663
      %v724 = vmul.f32 %v723, %v722
      %v725 = vmul.f32 0.5, %v724
      %v726 = vsub.f32 1.5, %v725
      %v727 = vmul.f32 %v722, %v726
      %vm728 = vweird.f32 %v663
      %vm729 = vweird.f32 %v722
      %vm730 = vmor %vm728, %vm729
      %v731 = vsel %vm730, %v722, %v727
      %v732 = vrsqrt.pop %v664
      %v733 = vmul.f32 %v732, %v664
      %v734 = vmul.f32 %v733, %v732
      %v735 = vmul.f32 0.5, %v734
      %v736 = vsub.f32 1.5, %v735
      %v737 = vmul.f32 %v732, %v736
      %vm738 = vweird.f32 %v664
      %vm739 = vweird.f32 %v732
      %vm740 = vmor %vm738, %vm739
      %v741 = vsel %vm740, %v732, %v737
      %v742 = vrsqrt.pop %v665
      %v743 = vmul.f32 %v742, %v665
      %v744 = vmul.f32 %v743, %v742
      %v745 = vmul.f32 0.5, %v744
      %v746 = vsub.f32 1.5, %v745
      %v747 = vmul.f32 %v742, %v746
      %vm748 = vweird.f32 %v665
      %vm749 = vweird.f32 %v742
      %vm750 = vmor %vm748, %vm749
      %v751 = vsel %vm750, %v742, %v747
      %v752 = vrsqrt.pop %v666
      %v753 = vmul.f32 %v752, %v666
      %v754 = vmul.f32 %v753, %v752
      %v755 = vmul.f32 0.5, %v754
      %v756 = vsub.f32 1.5, %v755
      %v757 = vmul.f32 %v752, %v756
      %vm758 = vweird.f32 %v666
      %vm759 = vweird.f32 %v752
      %vm760 = vmor %vm758, %vm759
      %v761 = vsel %vm760, %v752, %v757
      %v762 = vrsqrt.pop %v667
      %v763 = vmul.f32 %v762, %v667
      %v764 = vmul.f32 %v763, %v762
      %v765 = vmul.f32 0.5, %v764
      %v766 = vsub.f32 1.5, %v765
      %v767 = vmul.f32 %v762, %v766
      %vm768 = vweird.f32 %v667
      %vm769 = vweird.f32 %v762
      %vm770 = vmor %vm768, %vm769
      %v771 = vsel %vm770, %v762, %v767
      %v772 = vrsqrt.pop %v668
      %v773 = vmul.f32 %v772, %v668
      %v774 = vmul.f32 %v773, %v772
      %v775 = vmul.f32 0.5, %v774
      %v776 = vsub.f32 1.5, %v775
      %v777 = vmul.f32 %v772, %v776
      %vm778 = vweird.f32 %v668
      %vm779 = vweird.f32 %v772
      %vm780 = vmor %vm778, %vm779
      %v781 = vsel %vm780, %v772, %v777
      %v782 = vrsqrt.pop %v669
      %v783 = vmul.f32 %v782, %v669
      %v784 = vmul.f32 %v783, %v782
      %v785 = vmul.f32 0.5, %v784
      %v786 = vsub.f32 1.5, %v785
      %v787 = vmul.f32 %v782, %v786
      %vm788 = vweird.f32 %v669
      %vm789 = vweird.f32 %v782
      %vm790 = vmor %vm788, %vm789
      %v791 = vsel %vm790, %v782, %v787
      %v792 = vrsqrt.pop %v670
      %v793 = vmul.f32 %v792, %v670
      %v794 = vmul.f32 %v793, %v792
      %v795 = vmul.f32 0.5, %v794
      %v796 = vsub.f32 1.5, %v795
      %v797 = vmul.f32 %v792, %v796
      %vm798 = vweird.f32 %v670
      %vm799 = vweird.f32 %v792
      %vm800 = vmor %vm798, %vm799
      %v801 = vsel %vm800, %v792, %v797
      %v802 = vrsqrt.pop %v671
      %v803 = vmul.f32 %v802, %v671
      %v804 = vmul.f32 %v803, %v802
      %v805 = vmul.f32 0.5, %v804
      %v806 = vsub.f32 1.5, %v805
      %v807 = vmul.f32 %v802, %v806
      %vm808 = vweird.f32 %v671
      %vm809 = vweird.f32 %v802
      %vm810 = vmor %vm808, %vm809
      %v811 = vsel %vm810, %v802, %v807
      %v812 = vrsqrt.pop %v672
      %v813 = vmul.f32 %v812, %v672
      %v814 = vmul.f32 %v813, %v812
      %v815 = vmul.f32 0.5, %v814
      %v816 = vsub.f32 1.5, %v815
      %v817 = vmul.f32 %v812, %v816
      %vm818 = vweird.f32 %v672
      %vm819 = vweird.f32 %v812
      %vm820 = vmor %vm818, %vm819
      %v821 = vsel %vm820, %v812, %v817
      %v822 = vrsqrt.pop %v673
      %v823 = vmul.f32 %v822, %v673
      %v824 = vmul.f32 %v823, %v822
      %v825 = vmul.f32 0.5, %v824
      %v826 = vsub.f32 1.5, %v825
      %v827 = vmul.f32 %v822, %v826
      %vm828 = vweird.f32 %v673
      %vm829 = vweird.f32 %v822
      %vm830 = vmor %vm828, %vm829
      %v831 = vsel %vm830, %v822, %v827
      %v832 = vrsqrt.pop %v674
      %v833 = vmul.f32 %v832, %v674
      %v834 = vmul.f32 %v833, %v832
      %v835 = vmul.f32 0.5, %v834
      %v836 = vsub.f32 1.5, %v835
      %v837 = vmul.f32 %v832, %v836
      %vm838 = vweird.f32 %v674
      %vm839 = vweird.f32 %v832
      %vm840 = vmor %vm838, %vm839
      %v841 = vsel %vm840, %v832, %v837
      %v842 = vrsqrt.pop %v675
      %v843 = vmul.f32 %v842, %v675
      %v844 = vmul.f32 %v843, %v842
      %v845 = vmul.f32 0.5, %v844
      %v846 = vsub.f32 1.5, %v845
      %v847 = vmul.f32 %v842, %v846
      %vm848 = vweird.f32 %v675
      %vm849 = vweird.f32 %v842
      %vm850 = vmor %vm848, %vm849
      %v851 = vsel %vm850, %v842, %v847
      %v852 = vrsqrt.pop %v676
      %v853 = vmul.f32 %v852, %v676
      %v854 = vmul.f32 %v853, %v852
      %v855 = vmul.f32 0.5, %v854
      %v856 = vsub.f32 1.5, %v855
      %v857 = vmul.f32 %v852, %v856
      %vm858 = vweird.f32 %v676
      %vm859 = vweird.f32 %v852
      %vm860 = vmor %vm858, %vm859
      %v861 = vsel %vm860, %v852, %v857
      %v862 = vrsqrt.pop %v677
      %v863 = vmul.f32 %v862, %v677
      %v864 = vmul.f32 %v863, %v862
      %v865 = vmul.f32 0.5, %v864
      %v866 = vsub.f32 1.5, %v865
      %v867 = vmul.f32 %v862, %v866
      %vm868 = vweird.f32 %v677
      %vm869 = vweird.f32 %v862
      %vm870 = vmor %vm868, %vm869
      %v871 = vsel %vm870, %v862, %v867
      %v872 = vrsqrt.pop %v678
      %v873 = vmul.f32 %v872, %v678
      %v874 = vmul.f32 %v873, %v872
      %v875 = vmul.f32 0.5, %v874
      %v876 = vsub.f32 1.5, %v875
      %v877 = vmul.f32 %v872, %v876
      %vm878 = vweird.f32 %v678
      %vm879 = vweird.f32 %v872
      %vm880 = vmor %vm878, %vm879
      %v881 = vsel %vm880, %v872, %v877
      %v882 = vrsqrt.pop %v679
      %v883 = vmul.f32 %v882, %v679
      %v884 = vmul.f32 %v883, %v882
      %v885 = vmul.f32 0.5, %v884
      %v886 = vsub.f32 1.5, %v885
      %v887 = vmul.f32 %v882, %v886
      %vm888 = vweird.f32 %v679
      %vm889 = vweird.f32 %v882
      %vm890 = vmor %vm888, %vm889
      %v891 = vsel %vm890, %v882, %v887
      %v892 = vrsqrt.pop %v680
      %v893 = vmul.f32 %v892, %v680
      %v894 = vmul.f32 %v893, %v892
      %v895 = vmul.f32 0.5, %v894
      %v896 = vsub.f32 1.5, %v895
      %v897 = vmul.f32 %v892, %v896
      %vm898 = vweird.f32 %v680
      %vm899 = vweird.f32 %v892
      %vm900 = vmor %vm898, %vm899
      %v901 = vsel %vm900, %v892, %v897
      %v902 = vrsqrt.pop %v681
      %v903 = vmul.f32 %v902, %v681
      %v904 = vmul.f32 %v903, %v902
      %v905 = vmul.f32 0.5, %v904
      %v906 = vsub.f32 1.5, %v905
      %v907 = vmul.f32 %v902, %v906
      %vm908 = vweird.f32 %v681
      %vm909 = vweird.f32 %v902
      %vm910 = vmor %vm908, %vm909
      %v911 = vsel %vm910, %v902, %v907
      %v912 = vrsqrt.pop %v682
      %v913 = vmul.f32 %v912, %v682
      %v914 = vmul.f32 %v913, %v912
      %v915 = vmul.f32 0.5, %v914
      %v916 = vsub.f32 1.5, %v915
      %v917 = vmul.f32 %v912, %v916
      %vm918 = vweird.f32 %v682
      %vm919 = vweird.f32 %v912
      %vm920 = vmor %vm918, %vm919
      %v921 = vsel %vm920, %v912, %v917
      %v922 = vrsqrt.pop %v683
      %v923 = vmul.f32 %v922, %v683
      %v924 = vmul.f32 %v923, %v922
      %v925 = vmul.f32 0.5, %v924
      %v926 = vsub.f32 1.5, %v925
      %v927 = vmul.f32 %v922, %v926
      %vm928 = vweird.f32 %v683
      %vm929 = vweird.f32 %v922
      %vm930 = vmor %vm928, %vm929
      %v931 = vsel %vm930, %v922, %v927
      %v932 = vrsqrt.pop %v684
      %v933 = vmul.f32 %v932, %v684
      %v934 = vmul.f32 %v933, %v932
      %v935 = vmul.f32 0.5, %v934
      %v936 = vsub.f32 1.5, %v935
      %v937 = vmul.f32 %v932, %v936
      %vm938 = vweird.f32 %v684
      %vm939 = vweird.f32 %v932
      %vm940 = vmor %vm938, %vm939
      %v941 = vsel %vm940, %v932, %v937
      %v942 = vrsqrt.pop %v685
      %v943 = vmul.f32 %v942, %v685
      %v944 = vmul.f32 %v943, %v942
      %v945 = vmul.f32 0.5, %v944
      %v946 = vsub.f32 1.5, %v945
      %v947 = vmul.f32 %v942, %v946
      %vm948 = vweird.f32 %v685
      %vm949 = vweird.f32 %v942
      %vm950 = vmor %vm948, %vm949
      %v951 = vsel %vm950, %v942, %v947
      %v952 = vrsqrt.pop %v686
      %v953 = vmul.f32 %v952, %v686
      %v954 = vmul.f32 %v953, %v952
      %v955 = vmul.f32 0.5, %v954
      %v956 = vsub.f32 1.5, %v955
      %v957 = vmul.f32 %v952, %v956
      %vm958 = vweird.f32 %v686
      %vm959 = vweird.f32 %v952
      %vm960 = vmor %vm958, %vm959
      %v961 = vsel %vm960, %v952, %v957
      %v962 = vrsqrt.pop %v687
      %v963 = vmul.f32 %v962, %v687
      %v964 = vmul.f32 %v963, %v962
      %v965 = vmul.f32 0.5, %v964
      %v966 = vsub.f32 1.5, %v965
      %v967 = vmul.f32 %v962, %v966
      %vm968 = vweird.f32 %v687
      %vm969 = vweird.f32 %v962
      %vm970 = vmor %vm968, %vm969
      %v971 = vsel %vm970, %v962, %v967
      %v972 = vrsqrt.pop %v688
      %v973 = vmul.f32 %v972, %v688
      %v974 = vmul.f32 %v973, %v972
      %v975 = vmul.f32 0.5, %v974
      %v976 = vsub.f32 1.5, %v975
      %v977 = vmul.f32 %v972, %v976
      %vm978 = vweird.f32 %v688
      %vm979 = vweird.f32 %v972
      %vm980 = vmor %vm978, %vm979
      %v981 = vsel %vm980, %v972, %v977
      %v982 = vrsqrt.pop %v689
      %v983 = vmul.f32 %v982, %v689
      %v984 = vmul.f32 %v983, %v982
      %v985 = vmul.f32 0.5, %v984
      %v986 = vsub.f32 1.5, %v985
      %v987 = vmul.f32 %v982, %v986
      %vm988 = vweird.f32 %v689
      %vm989 = vweird.f32 %v982
      %vm990 = vmor %vm988, %vm989
      %v991 = vsel %vm990, %v982, %v987
      %v992 = vrsqrt.pop %v690
      %v993 = vmul.f32 %v992, %v690
      %v994 = vmul.f32 %v993, %v992
      %v995 = vmul.f32 0.5, %v994
      %v996 = vsub.f32 1.5, %v995
      %v997 = vmul.f32 %v992, %v996
      %vm998 = vweird.f32 %v690
      %vm999 = vweird.f32 %v992
      %vm1000 = vmor %vm998, %vm999
      %v1001 = vsel %vm1000, %v992, %v997
      %v1002 = vrsqrt.pop %v691
      %v1003 = vmul.f32 %v1002, %v691
      %v1004 = vmul.f32 %v1003, %v1002
      %v1005 = vmul.f32 0.5, %v1004
      %v1006 = vsub.f32 1.5, %v1005
      %v1007 = vmul.f32 %v1002, %v1006
      %vm1008 = vweird.f32 %v691
      %vm1009 = vweird.f32 %v1002
      %vm1010 = vmor %vm1008, %vm1009
      %v1011 = vsel %vm1010, %v1002, %v1007
      %v1012 = vmul.f32 %v437, %v701
      %v1013 = vmul.f32 %v440, %v711
      %v1014 = vmul.f32 %v443, %v721
      %v1015 = vmul.f32 %v446, %v731
      %v1016 = vmul.f32 %v449, %v741
      %v1017 = vmul.f32 %v452, %v751
      %v1018 = vmul.f32 %v455, %v761
      %v1019 = vmul.f32 %v458, %v771
      %v1020 = vmul.f32 %v461, %v781
      %v1021 = vmul.f32 %v464, %v791
      %v1022 = vmul.f32 %v467, %v801
      %v1023 = vmul.f32 %v470, %v811
      %v1024 = vmul.f32 %v473, %v821
      %v1025 = vmul.f32 %v476, %v831
      %v1026 = vmul.f32 %v479, %v841
      %v1027 = vmul.f32 %v482, %v851
      %v1028 = vmul.f32 %v485, %v861
      %v1029 = vmul.f32 %v488, %v871
      %v1030 = vmul.f32 %v491, %v881
      %v1031 = vmul.f32 %v494, %v891
      %v1032 = vmul.f32 %v497, %v901
      %v1033 = vmul.f32 %v500, %v911
      %v1034 = vmul.f32 %v503, %v921
      %v1035 = vmul.f32 %v506, %v931
      %v1036 = vmul.f32 %v509, %v941
      %v1037 = vmul.f32 %v512, %v951
      %v1038 = vmul.f32 %v515, %v961
      %v1039 = vmul.f32 %v518, %v971
      %v1040 = vmul.f32 %v521, %v981
      %v1041 = vmul.f32 %v524, %v991
      %v1042 = vmul.f32 %v527, %v1001
      %v1043 = vmul.f32 %v530, %v1011
      %v1044 = vld [vmem:[%s3] sm:$0xff]
      %v1045 = vld [vmem:[%s3 + $0x8] sm:$0xff]
      %v1046 = vld [vmem:[%s3 + $0x10] sm:$0xff]
      %v1047 = vld [vmem:[%s3 + $0x18] sm:$0xff]
      %v1049 = vsel %vm322, %v1012, 0
      %v1052 = vsel %vm322, %v1013, 0
      %v1055 = vsel %vm322, %v1014, 0
      %v1058 = vsel %vm322, %v1015, 0
      %v1061 = vsel %vm322, %v1016, 0
      %v1064 = vsel %vm322, %v1017, 0
      %v1067 = vsel %vm322, %v1018, 0
      %v1070 = vsel %vm322, %v1019, 0
      %v1073 = vsel %vm322, %v1020, 0
      %v1076 = vsel %vm322, %v1021, 0
      %v1079 = vsel %vm322, %v1022, 0
      %v1082 = vsel %vm322, %v1023, 0
      %v1085 = vsel %vm322, %v1024, 0
      %v1088 = vsel %vm322, %v1025, 0
      %v1091 = vsel %vm322, %v1026, 0
      %v1094 = vsel %vm322, %v1027, 0
      %v1097 = vsel %vm322, %v1028, 0
      %v1100 = vsel %vm322, %v1029, 0
      %v1103 = vsel %vm322, %v1030, 0
      %v1106 = vsel %vm322, %v1031, 0
      %v1109 = vsel %vm322, %v1032, 0
      %v1112 = vsel %vm322, %v1033, 0
      %v1115 = vsel %vm322, %v1034, 0
      %v1118 = vsel %vm322, %v1035, 0
      %v1121 = vsel %vm322, %v1036, 0
      %v1124 = vsel %vm322, %v1037, 0
      %v1127 = vsel %vm322, %v1038, 0
      %v1130 = vsel %vm322, %v1039, 0
      %v1133 = vsel %vm322, %v1040, 0
      %v1136 = vsel %vm322, %v1041, 0
      %v1139 = vsel %vm322, %v1042, 0
      %v1142 = vsel %vm322, %v1043, 0
      %1144 = vmatpush.msra.mxu0 0.0
      %1145 = vmatpush.msra.mxu0 0.0
      %1146 = vmatpush.msra.mxu0 0.0
      %1147 = vmatpush.msra.mxu0 0.0
      %1148 = vmatpush.msra.mxu0 0.0
      %1149 = vmatpush.msra.mxu0 0.0
      %1150 = vmatpush.msra.mxu0 0.0
      %1151 = vmatpush.msra.mxu0 0.0
      %1152 = vmatpush.msra.mxu0 0.0
      %1153 = vmatpush.msra.mxu0 0.0
      %1154 = vmatpush.msra.mxu0 0.0
      %1155 = vmatpush.msra.mxu0 0.0
      %1156 = vmatpush.msra.mxu0 %v1047
      %1157 = vmatpush.msra.mxu0 %v1046
      %1158 = vmatpush.msra.mxu0 %v1045
      %1159 = vmatpush.msra.mxu0 %v1044
      %1160 = vmatmul.f32.gmra.mxu0 %v1049
      %v1161 = vpop.f32.mrf.mxu0
      %v1162 = vadd.f32 0.0, %v1161
      %1163 = vmatmul.f32.gmra.mxu0 %v1052
      %v1164 = vpop.f32.mrf.mxu0
      %v1165 = vadd.f32 0.0, %v1164
      %1166 = vmatmul.f32.gmra.mxu0 %v1055
      %v1167 = vpop.f32.mrf.mxu0
      %v1168 = vadd.f32 0.0, %v1167
      %1169 = vmatmul.f32.gmra.mxu0 %v1058
      %v1170 = vpop.f32.mrf.mxu0
      %v1171 = vadd.f32 0.0, %v1170
      %1172 = vmatmul.f32.gmra.mxu0 %v1061
      %v1173 = vpop.f32.mrf.mxu0
      %v1174 = vadd.f32 0.0, %v1173
      %1175 = vmatmul.f32.gmra.mxu0 %v1064
      %v1176 = vpop.f32.mrf.mxu0
      %v1177 = vadd.f32 0.0, %v1176
      %1178 = vmatmul.f32.gmra.mxu0 %v1067
      %v1179 = vpop.f32.mrf.mxu0
      %v1180 = vadd.f32 0.0, %v1179
      %1181 = vmatmul.f32.gmra.mxu0 %v1070
      %v1182 = vpop.f32.mrf.mxu0
      %v1183 = vadd.f32 0.0, %v1182
      %1184 = vmatmul.f32.gmra.mxu0 %v1073
      %v1185 = vpop.f32.mrf.mxu0
      %v1186 = vadd.f32 0.0, %v1185
      %1187 = vmatmul.f32.gmra.mxu0 %v1076
      %v1188 = vpop.f32.mrf.mxu0
      %v1189 = vadd.f32 0.0, %v1188
      %1190 = vmatmul.f32.gmra.mxu0 %v1079
      %v1191 = vpop.f32.mrf.mxu0
      %v1192 = vadd.f32 0.0, %v1191
      %1193 = vmatmul.f32.gmra.mxu0 %v1082
      %v1194 = vpop.f32.mrf.mxu0
      %v1195 = vadd.f32 0.0, %v1194
      %1196 = vmatmul.f32.gmra.mxu0 %v1085
      %v1197 = vpop.f32.mrf.mxu0
      %v1198 = vadd.f32 0.0, %v1197
      %1199 = vmatmul.f32.gmra.mxu0 %v1088
      %v1200 = vpop.f32.mrf.mxu0
      %v1201 = vadd.f32 0.0, %v1200
      %1202 = vmatmul.f32.gmra.mxu0 %v1091
      %v1203 = vpop.f32.mrf.mxu0
      %v1204 = vadd.f32 0.0, %v1203
      %1205 = vmatmul.f32.gmra.mxu0 %v1094
      %v1206 = vpop.f32.mrf.mxu0
      %v1207 = vadd.f32 0.0, %v1206
      %1208 = vmatmul.f32.gmra.mxu0 %v1097
      %v1209 = vpop.f32.mrf.mxu0
      %v1210 = vadd.f32 0.0, %v1209
      %1211 = vmatmul.f32.gmra.mxu0 %v1100
      %v1212 = vpop.f32.mrf.mxu0
      %v1213 = vadd.f32 0.0, %v1212
      %1214 = vmatmul.f32.gmra.mxu0 %v1103
      %v1215 = vpop.f32.mrf.mxu0
      %v1216 = vadd.f32 0.0, %v1215
      %1217 = vmatmul.f32.gmra.mxu0 %v1106
      %v1218 = vpop.f32.mrf.mxu0
      %v1219 = vadd.f32 0.0, %v1218
      %1220 = vmatmul.f32.gmra.mxu0 %v1109
      %v1221 = vpop.f32.mrf.mxu0
      %v1222 = vadd.f32 0.0, %v1221
      %1223 = vmatmul.f32.gmra.mxu0 %v1112
      %v1224 = vpop.f32.mrf.mxu0
      %v1225 = vadd.f32 0.0, %v1224
      %1226 = vmatmul.f32.gmra.mxu0 %v1115
      %v1227 = vpop.f32.mrf.mxu0
      %v1228 = vadd.f32 0.0, %v1227
      %1229 = vmatmul.f32.gmra.mxu0 %v1118
      %v1230 = vpop.f32.mrf.mxu0
      %v1231 = vadd.f32 0.0, %v1230
      %1232 = vmatmul.f32.gmra.mxu0 %v1121
      %v1233 = vpop.f32.mrf.mxu0
      %v1234 = vadd.f32 0.0, %v1233
      %1235 = vmatmul.f32.gmra.mxu0 %v1124
      %v1236 = vpop.f32.mrf.mxu0
      %v1237 = vadd.f32 0.0, %v1236
      %1238 = vmatmul.f32.gmra.mxu0 %v1127
      %v1239 = vpop.f32.mrf.mxu0
      %v1240 = vadd.f32 0.0, %v1239
      %1241 = vmatmul.f32.gmra.mxu0 %v1130
      %v1242 = vpop.f32.mrf.mxu0
      %v1243 = vadd.f32 0.0, %v1242
      %1244 = vmatmul.f32.gmra.mxu0 %v1133
      %v1245 = vpop.f32.mrf.mxu0
      %v1246 = vadd.f32 0.0, %v1245
      %1247 = vmatmul.f32.gmra.mxu0 %v1136
      %v1248 = vpop.f32.mrf.mxu0
      %v1249 = vadd.f32 0.0, %v1248
      %1250 = vmatmul.f32.gmra.mxu0 %v1139
      %v1251 = vpop.f32.mrf.mxu0
      %v1252 = vadd.f32 0.0, %v1251
      %1253 = vmatmul.f32.gmra.mxu0 %v1142
      %v1254 = vpop.f32.mrf.mxu0
      %v1255 = vadd.f32 0.0, %v1254
      %1256 = vdwg.mxu0
      %v1257 = vmul.f32 %v1162, 1.442695
      %v1258 = vpow.pop %v1257
      %v1259 = vmul.f32 %v1165, 1.442695
      %v1260 = vpow.pop %v1259
      %v1261 = vmul.f32 %v1168, 1.442695
      %v1262 = vpow.pop %v1261
      %v1263 = vmul.f32 %v1171, 1.442695
      %v1264 = vpow.pop %v1263
      %v1265 = vmul.f32 %v1174, 1.442695
      %v1266 = vpow.pop %v1265
      %v1267 = vmul.f32 %v1177, 1.442695
      %v1268 = vpow.pop %v1267
      %v1269 = vmul.f32 %v1180, 1.442695
      %v1270 = vpow.pop %v1269
      %v1271 = vmul.f32 %v1183, 1.442695
      %v1272 = vpow.pop %v1271
      %v1273 = vmul.f32 %v1186, 1.442695
      %v1274 = vpow.pop %v1273
      %v1275 = vmul.f32 %v1189, 1.442695
      %v1276 = vpow.pop %v1275
      %v1277 = vmul.f32 %v1192, 1.442695
      %v1278 = vpow.pop %v1277
      %v1279 = vmul.f32 %v1195, 1.442695
      %v1280 = vpow.pop %v1279
      %v1281 = vmul.f32 %v1198, 1.442695
      %v1282 = vpow.pop %v1281
      %v1283 = vmul.f32 %v1201, 1.442695
      %v1284 = vpow.pop %v1283
      %v1285 = vmul.f32 %v1204, 1.442695
      %v1286 = vpow.pop %v1285
      %v1287 = vmul.f32 %v1207, 1.442695
      %v1288 = vpow.pop %v1287
      %v1289 = vmul.f32 %v1210, 1.442695
      %v1290 = vpow.pop %v1289
      %v1291 = vmul.f32 %v1213, 1.442695
      %v1292 = vpow.pop %v1291
      %v1293 = vmul.f32 %v1216, 1.442695
      %v1294 = vpow.pop %v1293
      %v1295 = vmul.f32 %v1219, 1.442695
      %v1296 = vpow.pop %v1295
      %v1297 = vmul.f32 %v1222, 1.442695
      %v1298 = vpow.pop %v1297
      %v1299 = vmul.f32 %v1225, 1.442695
      %v1300 = vpow.pop %v1299
      %v1301 = vmul.f32 %v1228, 1.442695
      %v1302 = vpow.pop %v1301
      %v1303 = vmul.f32 %v1231, 1.442695
      %v1304 = vpow.pop %v1303
      %v1305 = vmul.f32 %v1234, 1.442695
      %v1306 = vpow.pop %v1305
      %v1307 = vmul.f32 %v1237, 1.442695
      %v1308 = vpow.pop %v1307
      %v1309 = vmul.f32 %v1240, 1.442695
      %v1310 = vpow.pop %v1309
      %v1311 = vmul.f32 %v1243, 1.442695
      %v1312 = vpow.pop %v1311
      %v1313 = vmul.f32 %v1246, 1.442695
      %v1314 = vpow.pop %v1313
      %v1315 = vmul.f32 %v1249, 1.442695
      %v1316 = vpow.pop %v1315
      %v1317 = vmul.f32 %v1252, 1.442695
      %v1318 = vpow.pop %v1317
      %v1319 = vmul.f32 %v1255, 1.442695
      %v1320 = vpow.pop %v1319
      %vm1321 = vcmask 130048
      %v1322 = vsel %vm1321, %v1258, 0.0
      %1323 = vadd.xlane.f32.xlu0 %v1322
      %v1324 = vpop.xlane.xlu0 %1323
      %v1325 = vsel %vm1321, %v1260, 0.0
      %1326 = vadd.xlane.f32.xlu0 %v1325
      %v1327 = vpop.xlane.xlu0 %1326
      %v1328 = vsel %vm1321, %v1262, 0.0
      %1329 = vadd.xlane.f32.xlu0 %v1328
      %v1330 = vpop.xlane.xlu0 %1329
      %v1331 = vsel %vm1321, %v1264, 0.0
      %1332 = vadd.xlane.f32.xlu0 %v1331
      %v1333 = vpop.xlane.xlu0 %1332
      %v1334 = vsel %vm1321, %v1266, 0.0
      %1335 = vadd.xlane.f32.xlu0 %v1334
      %v1336 = vpop.xlane.xlu0 %1335
      %v1337 = vsel %vm1321, %v1268, 0.0
      %1338 = vadd.xlane.f32.xlu0 %v1337
      %v1339 = vpop.xlane.xlu0 %1338
      %v1340 = vsel %vm1321, %v1270, 0.0
      %1341 = vadd.xlane.f32.xlu0 %v1340
      %v1342 = vpop.xlane.xlu0 %1341
      %v1343 = vsel %vm1321, %v1272, 0.0
      %1344 = vadd.xlane.f32.xlu0 %v1343
      %v1345 = vpop.xlane.xlu0 %1344
      %v1346 = vsel %vm1321, %v1274, 0.0
      %1347 = vadd.xlane.f32.xlu0 %v1346
      %v1348 = vpop.xlane.xlu0 %1347
      %v1349 = vsel %vm1321, %v1276, 0.0
      %1350 = vadd.xlane.f32.xlu0 %v1349
      %v1351 = vpop.xlane.xlu0 %1350
      %v1352 = vsel %vm1321, %v1278, 0.0
      %1353 = vadd.xlane.f32.xlu0 %v1352
      %v1354 = vpop.xlane.xlu0 %1353
      %v1355 = vsel %vm1321, %v1280, 0.0
      %1356 = vadd.xlane.f32.xlu0 %v1355
      %v1357 = vpop.xlane.xlu0 %1356
      %v1358 = vsel %vm1321, %v1282, 0.0
      %1359 = vadd.xlane.f32.xlu0 %v1358
      %v1360 = vpop.xlane.xlu0 %1359
      %v1361 = vsel %vm1321, %v1284, 0.0
      %1362 = vadd.xlane.f32.xlu0 %v1361
      %v1363 = vpop.xlane.xlu0 %1362
      %v1364 = vsel %vm1321, %v1286, 0.0
      %1365 = vadd.xlane.f32.xlu0 %v1364
      %v1366 = vpop.xlane.xlu0 %1365
      %v1367 = vsel %vm1321, %v1288, 0.0
      %1368 = vadd.xlane.f32.xlu0 %v1367
      %v1369 = vpop.xlane.xlu0 %1368
      %v1370 = vsel %vm1321, %v1290, 0.0
      %1371 = vadd.xlane.f32.xlu0 %v1370
      %v1372 = vpop.xlane.xlu0 %1371
      %v1373 = vsel %vm1321, %v1292, 0.0
      %1374 = vadd.xlane.f32.xlu0 %v1373
      %v1375 = vpop.xlane.xlu0 %1374
      %v1376 = vsel %vm1321, %v1294, 0.0
      %1377 = vadd.xlane.f32.xlu0 %v1376
      %v1378 = vpop.xlane.xlu0 %1377
      %v1379 = vsel %vm1321, %v1296, 0.0
      %1380 = vadd.xlane.f32.xlu0 %v1379
      %v1381 = vpop.xlane.xlu0 %1380
      %v1382 = vsel %vm1321, %v1298, 0.0
      %1383 = vadd.xlane.f32.xlu0 %v1382
      %v1384 = vpop.xlane.xlu0 %1383
      %v1385 = vsel %vm1321, %v1300, 0.0
      %1386 = vadd.xlane.f32.xlu0 %v1385
      %v1387 = vpop.xlane.xlu0 %1386
      %v1388 = vsel %vm1321, %v1302, 0.0
      %1389 = vadd.xlane.f32.xlu0 %v1388
      %v1390 = vpop.xlane.xlu0 %1389
      %v1391 = vsel %vm1321, %v1304, 0.0
      %1392 = vadd.xlane.f32.xlu0 %v1391
      %v1393 = vpop.xlane.xlu0 %1392
      %v1394 = vsel %vm1321, %v1306, 0.0
      %1395 = vadd.xlane.f32.xlu0 %v1394
      %v1396 = vpop.xlane.xlu0 %1395
      %v1397 = vsel %vm1321, %v1308, 0.0
      %1398 = vadd.xlane.f32.xlu0 %v1397
      %v1399 = vpop.xlane.xlu0 %1398
      %v1400 = vsel %vm1321, %v1310, 0.0
      %1401 = vadd.xlane.f32.xlu0 %v1400
      %v1402 = vpop.xlane.xlu0 %1401
      %v1403 = vsel %vm1321, %v1312, 0.0
      %1404 = vadd.xlane.f32.xlu0 %v1403
      %v1405 = vpop.xlane.xlu0 %1404
      %v1406 = vsel %vm1321, %v1314, 0.0
      %1407 = vadd.xlane.f32.xlu0 %v1406
      %v1408 = vpop.xlane.xlu0 %1407
      %v1409 = vsel %vm1321, %v1316, 0.0
      %1410 = vadd.xlane.f32.xlu0 %v1409
      %v1411 = vpop.xlane.xlu0 %1410
      %v1412 = vsel %vm1321, %v1318, 0.0
      %1413 = vadd.xlane.f32.xlu0 %v1412
      %v1414 = vpop.xlane.xlu0 %1413
      %v1415 = vsel %vm1321, %v1320, 0.0
      %1416 = vadd.xlane.f32.xlu0 %v1415
      %v1417 = vpop.xlane.xlu0 %1416
      %v1418 = vrcp.pop %v1324
      %v1419 = vmul.f32 %v1324, %v1418
      %v1420 = vsub.f32 1.0, %v1419
      %v1421 = vmul.f32 %v1418, %v1420
      %v1422 = vadd.f32 %v1418, %v1421
      %vm1423 = vweird.f32 %v1324
      %vm1424 = vweird.f32 %v1418
      %vm1425 = vmor %vm1423, %vm1424
      %v1426 = vsel %vm1425, %v1418, %v1422
      %v1427 = vand.u32 2147483647, %v1324
      %vm1428 = vcmp.eq.f32.partialorder %v1427, 8.507059e+37
      %v1429 = vand.u32 %v1324, 2147483648
      %v1430 = vor.u32 1.1754944e-38, %v1429
      %v1431 = vsel %vm1428, %v1430, %v1426
      %v1432 = vmul.f32 %v1258, %v1431
      %v1433 = vrcp.pop %v1327
      %v1434 = vmul.f32 %v1327, %v1433
      %v1435 = vsub.f32 1.0, %v1434
      %v1436 = vmul.f32 %v1433, %v1435
      %v1437 = vadd.f32 %v1433, %v1436
      %vm1438 = vweird.f32 %v1327
      %vm1439 = vweird.f32 %v1433
      %vm1440 = vmor %vm1438, %vm1439
      %v1441 = vsel %vm1440, %v1433, %v1437
      %v1442 = vand.u32 2147483647, %v1327
      %vm1443 = vcmp.eq.f32.partialorder %v1442, 8.507059e+37
      %v1444 = vand.u32 %v1327, 2147483648
      %v1445 = vor.u32 1.1754944e-38, %v1444
      %v1446 = vsel %vm1443, %v1445, %v1441
      %v1447 = vmul.f32 %v1260, %v1446
      %v1448 = vrcp.pop %v1330
      %v1449 = vmul.f32 %v1330, %v1448
      %v1450 = vsub.f32 1.0, %v1449
      %v1451 = vmul.f32 %v1448, %v1450
      %v1452 = vadd.f32 %v1448, %v1451
      %vm1453 = vweird.f32 %v1330
      %vm1454 = vweird.f32 %v1448
      %vm1455 = vmor %vm1453, %vm1454
      %v1456 = vsel %vm1455, %v1448, %v1452
      %v1457 = vand.u32 2147483647, %v1330
      %vm1458 = vcmp.eq.f32.partialorder %v1457, 8.507059e+37
      %v1459 = vand.u32 %v1330, 2147483648
      %v1460 = vor.u32 1.1754944e-38, %v1459
      %v1461 = vsel %vm1458, %v1460, %v1456
      %v1462 = vmul.f32 %v1262, %v1461
      %v1463 = vrcp.pop %v1333
      %v1464 = vmul.f32 %v1333, %v1463
      %v1465 = vsub.f32 1.0, %v1464
      %v1466 = vmul.f32 %v1463, %v1465
      %v1467 = vadd.f32 %v1463, %v1466
      %vm1468 = vweird.f32 %v1333
      %vm1469 = vweird.f32 %v1463
      %vm1470 = vmor %vm1468, %vm1469
      %v1471 = vsel %vm1470, %v1463, %v1467
      %v1472 = vand.u32 2147483647, %v1333
      %vm1473 = vcmp.eq.f32.partialorder %v1472, 8.507059e+37
      %v1474 = vand.u32 %v1333, 2147483648
      %v1475 = vor.u32 1.1754944e-38, %v1474
      %v1476 = vsel %vm1473, %v1475, %v1471
      %v1477 = vmul.f32 %v1264, %v1476
      %v1478 = vrcp.pop %v1336
      %v1479 = vmul.f32 %v1336, %v1478
      %v1480 = vsub.f32 1.0, %v1479
      %v1481 = vmul.f32 %v1478, %v1480
      %v1482 = vadd.f32 %v1478, %v1481
      %vm1483 = vweird.f32 %v1336
      %vm1484 = vweird.f32 %v1478
      %vm1485 = vmor %vm1483, %vm1484
      %v1486 = vsel %vm1485, %v1478, %v1482
      %v1487 = vand.u32 2147483647, %v1336
      %vm1488 = vcmp.eq.f32.partialorder %v1487, 8.507059e+37
      %v1489 = vand.u32 %v1336, 2147483648
      %v1490 = vor.u32 1.1754944e-38, %v1489
      %v1491 = vsel %vm1488, %v1490, %v1486
      %v1492 = vmul.f32 %v1266, %v1491
      %v1493 = vrcp.pop %v1339
      %v1494 = vmul.f32 %v1339, %v1493
      %v1495 = vsub.f32 1.0, %v1494
      %v1496 = vmul.f32 %v1493, %v1495
      %v1497 = vadd.f32 %v1493, %v1496
      %vm1498 = vweird.f32 %v1339
      %vm1499 = vweird.f32 %v1493
      %vm1500 = vmor %vm1498, %vm1499
      %v1501 = vsel %vm1500, %v1493, %v1497
      %v1502 = vand.u32 2147483647, %v1339
      %vm1503 = vcmp.eq.f32.partialorder %v1502, 8.507059e+37
      %v1504 = vand.u32 %v1339, 2147483648
      %v1505 = vor.u32 1.1754944e-38, %v1504
      %v1506 = vsel %vm1503, %v1505, %v1501
      %v1507 = vmul.f32 %v1268, %v1506
      %v1508 = vrcp.pop %v1342
      %v1509 = vmul.f32 %v1342, %v1508
      %v1510 = vsub.f32 1.0, %v1509
      %v1511 = vmul.f32 %v1508, %v1510
      %v1512 = vadd.f32 %v1508, %v1511
      %vm1513 = vweird.f32 %v1342
      %vm1514 = vweird.f32 %v1508
      %vm1515 = vmor %vm1513, %vm1514
      %v1516 = vsel %vm1515, %v1508, %v1512
      %v1517 = vand.u32 2147483647, %v1342
      %vm1518 = vcmp.eq.f32.partialorder %v1517, 8.507059e+37
      %v1519 = vand.u32 %v1342, 2147483648
      %v1520 = vor.u32 1.1754944e-38, %v1519
      %v1521 = vsel %vm1518, %v1520, %v1516
      %v1522 = vmul.f32 %v1270, %v1521
      %v1523 = vrcp.pop %v1345
      %v1524 = vmul.f32 %v1345, %v1523
      %v1525 = vsub.f32 1.0, %v1524
      %v1526 = vmul.f32 %v1523, %v1525
      %v1527 = vadd.f32 %v1523, %v1526
      %vm1528 = vweird.f32 %v1345
      %vm1529 = vweird.f32 %v1523
      %vm1530 = vmor %vm1528, %vm1529
      %v1531 = vsel %vm1530, %v1523, %v1527
      %v1532 = vand.u32 2147483647, %v1345
      %vm1533 = vcmp.eq.f32.partialorder %v1532, 8.507059e+37
      %v1534 = vand.u32 %v1345, 2147483648
      %v1535 = vor.u32 1.1754944e-38, %v1534
      %v1536 = vsel %vm1533, %v1535, %v1531
      %v1537 = vmul.f32 %v1272, %v1536
      %v1538 = vrcp.pop %v1348
      %v1539 = vmul.f32 %v1348, %v1538
      %v1540 = vsub.f32 1.0, %v1539
      %v1541 = vmul.f32 %v1538, %v1540
      %v1542 = vadd.f32 %v1538, %v1541
      %vm1543 = vweird.f32 %v1348
      %vm1544 = vweird.f32 %v1538
      %vm1545 = vmor %vm1543, %vm1544
      %v1546 = vsel %vm1545, %v1538, %v1542
      %v1547 = vand.u32 2147483647, %v1348
      %vm1548 = vcmp.eq.f32.partialorder %v1547, 8.507059e+37
      %v1549 = vand.u32 %v1348, 2147483648
      %v1550 = vor.u32 1.1754944e-38, %v1549
      %v1551 = vsel %vm1548, %v1550, %v1546
      %v1552 = vmul.f32 %v1274, %v1551
      %v1553 = vrcp.pop %v1351
      %v1554 = vmul.f32 %v1351, %v1553
      %v1555 = vsub.f32 1.0, %v1554
      %v1556 = vmul.f32 %v1553, %v1555
      %v1557 = vadd.f32 %v1553, %v1556
      %vm1558 = vweird.f32 %v1351
      %vm1559 = vweird.f32 %v1553
      %vm1560 = vmor %vm1558, %vm1559
      %v1561 = vsel %vm1560, %v1553, %v1557
      %v1562 = vand.u32 2147483647, %v1351
      %vm1563 = vcmp.eq.f32.partialorder %v1562, 8.507059e+37
      %v1564 = vand.u32 %v1351, 2147483648
      %v1565 = vor.u32 1.1754944e-38, %v1564
      %v1566 = vsel %vm1563, %v1565, %v1561
      %v1567 = vmul.f32 %v1276, %v1566
      %v1568 = vrcp.pop %v1354
      %v1569 = vmul.f32 %v1354, %v1568
      %v1570 = vsub.f32 1.0, %v1569
      %v1571 = vmul.f32 %v1568, %v1570
      %v1572 = vadd.f32 %v1568, %v1571
      %vm1573 = vweird.f32 %v1354
      %vm1574 = vweird.f32 %v1568
      %vm1575 = vmor %vm1573, %vm1574
      %v1576 = vsel %vm1575, %v1568, %v1572
      %v1577 = vand.u32 2147483647, %v1354
      %vm1578 = vcmp.eq.f32.partialorder %v1577, 8.507059e+37
      %v1579 = vand.u32 %v1354, 2147483648
      %v1580 = vor.u32 1.1754944e-38, %v1579
      %v1581 = vsel %vm1578, %v1580, %v1576
      %v1582 = vmul.f32 %v1278, %v1581
      %v1583 = vrcp.pop %v1357
      %v1584 = vmul.f32 %v1357, %v1583
      %v1585 = vsub.f32 1.0, %v1584
      %v1586 = vmul.f32 %v1583, %v1585
      %v1587 = vadd.f32 %v1583, %v1586
      %vm1588 = vweird.f32 %v1357
      %vm1589 = vweird.f32 %v1583
      %vm1590 = vmor %vm1588, %vm1589
      %v1591 = vsel %vm1590, %v1583, %v1587
      %v1592 = vand.u32 2147483647, %v1357
      %vm1593 = vcmp.eq.f32.partialorder %v1592, 8.507059e+37
      %v1594 = vand.u32 %v1357, 2147483648
      %v1595 = vor.u32 1.1754944e-38, %v1594
      %v1596 = vsel %vm1593, %v1595, %v1591
      %v1597 = vmul.f32 %v1280, %v1596
      %v1598 = vrcp.pop %v1360
      %v1599 = vmul.f32 %v1360, %v1598
      %v1600 = vsub.f32 1.0, %v1599
      %v1601 = vmul.f32 %v1598, %v1600
      %v1602 = vadd.f32 %v1598, %v1601
      %vm1603 = vweird.f32 %v1360
      %vm1604 = vweird.f32 %v1598
      %vm1605 = vmor %vm1603, %vm1604
      %v1606 = vsel %vm1605, %v1598, %v1602
      %v1607 = vand.u32 2147483647, %v1360
      %vm1608 = vcmp.eq.f32.partialorder %v1607, 8.507059e+37
      %v1609 = vand.u32 %v1360, 2147483648
      %v1610 = vor.u32 1.1754944e-38, %v1609
      %v1611 = vsel %vm1608, %v1610, %v1606
      %v1612 = vmul.f32 %v1282, %v1611
      %v1613 = vrcp.pop %v1363
      %v1614 = vmul.f32 %v1363, %v1613
      %v1615 = vsub.f32 1.0, %v1614
      %v1616 = vmul.f32 %v1613, %v1615
      %v1617 = vadd.f32 %v1613, %v1616
      %vm1618 = vweird.f32 %v1363
      %vm1619 = vweird.f32 %v1613
      %vm1620 = vmor %vm1618, %vm1619
      %v1621 = vsel %vm1620, %v1613, %v1617
      %v1622 = vand.u32 2147483647, %v1363
      %vm1623 = vcmp.eq.f32.partialorder %v1622, 8.507059e+37
      %v1624 = vand.u32 %v1363, 2147483648
      %v1625 = vor.u32 1.1754944e-38, %v1624
      %v1626 = vsel %vm1623, %v1625, %v1621
      %v1627 = vmul.f32 %v1284, %v1626
      %v1628 = vrcp.pop %v1366
      %v1629 = vmul.f32 %v1366, %v1628
      %v1630 = vsub.f32 1.0, %v1629
      %v1631 = vmul.f32 %v1628, %v1630
      %v1632 = vadd.f32 %v1628, %v1631
      %vm1633 = vweird.f32 %v1366
      %vm1634 = vweird.f32 %v1628
      %vm1635 = vmor %vm1633, %vm1634
      %v1636 = vsel %vm1635, %v1628, %v1632
      %v1637 = vand.u32 2147483647, %v1366
      %vm1638 = vcmp.eq.f32.partialorder %v1637, 8.507059e+37
      %v1639 = vand.u32 %v1366, 2147483648
      %v1640 = vor.u32 1.1754944e-38, %v1639
      %v1641 = vsel %vm1638, %v1640, %v1636
      %v1642 = vmul.f32 %v1286, %v1641
      %v1643 = vrcp.pop %v1369
      %v1644 = vmul.f32 %v1369, %v1643
      %v1645 = vsub.f32 1.0, %v1644
      %v1646 = vmul.f32 %v1643, %v1645
      %v1647 = vadd.f32 %v1643, %v1646
      %vm1648 = vweird.f32 %v1369
      %vm1649 = vweird.f32 %v1643
      %vm1650 = vmor %vm1648, %vm1649
      %v1651 = vsel %vm1650, %v1643, %v1647
      %v1652 = vand.u32 2147483647, %v1369
      %vm1653 = vcmp.eq.f32.partialorder %v1652, 8.507059e+37
      %v1654 = vand.u32 %v1369, 2147483648
      %v1655 = vor.u32 1.1754944e-38, %v1654
      %v1656 = vsel %vm1653, %v1655, %v1651
      %v1657 = vmul.f32 %v1288, %v1656
      %v1658 = vrcp.pop %v1372
      %v1659 = vmul.f32 %v1372, %v1658
      %v1660 = vsub.f32 1.0, %v1659
      %v1661 = vmul.f32 %v1658, %v1660
      %v1662 = vadd.f32 %v1658, %v1661
      %vm1663 = vweird.f32 %v1372
      %vm1664 = vweird.f32 %v1658
      %vm1665 = vmor %vm1663, %vm1664
      %v1666 = vsel %vm1665, %v1658, %v1662
      %v1667 = vand.u32 2147483647, %v1372
      %vm1668 = vcmp.eq.f32.partialorder %v1667, 8.507059e+37
      %v1669 = vand.u32 %v1372, 2147483648
      %v1670 = vor.u32 1.1754944e-38, %v1669
      %v1671 = vsel %vm1668, %v1670, %v1666
      %v1672 = vmul.f32 %v1290, %v1671
      %v1673 = vrcp.pop %v1375
      %v1674 = vmul.f32 %v1375, %v1673
      %v1675 = vsub.f32 1.0, %v1674
      %v1676 = vmul.f32 %v1673, %v1675
      %v1677 = vadd.f32 %v1673, %v1676
      %vm1678 = vweird.f32 %v1375
      %vm1679 = vweird.f32 %v1673
      %vm1680 = vmor %vm1678, %vm1679
      %v1681 = vsel %vm1680, %v1673, %v1677
      %v1682 = vand.u32 2147483647, %v1375
      %vm1683 = vcmp.eq.f32.partialorder %v1682, 8.507059e+37
      %v1684 = vand.u32 %v1375, 2147483648
      %v1685 = vor.u32 1.1754944e-38, %v1684
      %v1686 = vsel %vm1683, %v1685, %v1681
      %v1687 = vmul.f32 %v1292, %v1686
      %v1688 = vrcp.pop %v1378
      %v1689 = vmul.f32 %v1378, %v1688
      %v1690 = vsub.f32 1.0, %v1689
      %v1691 = vmul.f32 %v1688, %v1690
      %v1692 = vadd.f32 %v1688, %v1691
      %vm1693 = vweird.f32 %v1378
      %vm1694 = vweird.f32 %v1688
      %vm1695 = vmor %vm1693, %vm1694
      %v1696 = vsel %vm1695, %v1688, %v1692
      %v1697 = vand.u32 2147483647, %v1378
      %vm1698 = vcmp.eq.f32.partialorder %v1697, 8.507059e+37
      %v1699 = vand.u32 %v1378, 2147483648
      %v1700 = vor.u32 1.1754944e-38, %v1699
      %v1701 = vsel %vm1698, %v1700, %v1696
      %v1702 = vmul.f32 %v1294, %v1701
      %v1703 = vrcp.pop %v1381
      %v1704 = vmul.f32 %v1381, %v1703
      %v1705 = vsub.f32 1.0, %v1704
      %v1706 = vmul.f32 %v1703, %v1705
      %v1707 = vadd.f32 %v1703, %v1706
      %vm1708 = vweird.f32 %v1381
      %vm1709 = vweird.f32 %v1703
      %vm1710 = vmor %vm1708, %vm1709
      %v1711 = vsel %vm1710, %v1703, %v1707
      %v1712 = vand.u32 2147483647, %v1381
      %vm1713 = vcmp.eq.f32.partialorder %v1712, 8.507059e+37
      %v1714 = vand.u32 %v1381, 2147483648
      %v1715 = vor.u32 1.1754944e-38, %v1714
      %v1716 = vsel %vm1713, %v1715, %v1711
      %v1717 = vmul.f32 %v1296, %v1716
      %v1718 = vrcp.pop %v1384
      %v1719 = vmul.f32 %v1384, %v1718
      %v1720 = vsub.f32 1.0, %v1719
      %v1721 = vmul.f32 %v1718, %v1720
      %v1722 = vadd.f32 %v1718, %v1721
      %vm1723 = vweird.f32 %v1384
      %vm1724 = vweird.f32 %v1718
      %vm1725 = vmor %vm1723, %vm1724
      %v1726 = vsel %vm1725, %v1718, %v1722
      %v1727 = vand.u32 2147483647, %v1384
      %vm1728 = vcmp.eq.f32.partialorder %v1727, 8.507059e+37
      %v1729 = vand.u32 %v1384, 2147483648
      %v1730 = vor.u32 1.1754944e-38, %v1729
      %v1731 = vsel %vm1728, %v1730, %v1726
      %v1732 = vmul.f32 %v1298, %v1731
      %v1733 = vrcp.pop %v1387
      %v1734 = vmul.f32 %v1387, %v1733
      %v1735 = vsub.f32 1.0, %v1734
      %v1736 = vmul.f32 %v1733, %v1735
      %v1737 = vadd.f32 %v1733, %v1736
      %vm1738 = vweird.f32 %v1387
      %vm1739 = vweird.f32 %v1733
      %vm1740 = vmor %vm1738, %vm1739
      %v1741 = vsel %vm1740, %v1733, %v1737
      %v1742 = vand.u32 2147483647, %v1387
      %vm1743 = vcmp.eq.f32.partialorder %v1742, 8.507059e+37
      %v1744 = vand.u32 %v1387, 2147483648
      %v1745 = vor.u32 1.1754944e-38, %v1744
      %v1746 = vsel %vm1743, %v1745, %v1741
      %v1747 = vmul.f32 %v1300, %v1746
      %v1748 = vrcp.pop %v1390
      %v1749 = vmul.f32 %v1390, %v1748
      %v1750 = vsub.f32 1.0, %v1749
      %v1751 = vmul.f32 %v1748, %v1750
      %v1752 = vadd.f32 %v1748, %v1751
      %vm1753 = vweird.f32 %v1390
      %vm1754 = vweird.f32 %v1748
      %vm1755 = vmor %vm1753, %vm1754
      %v1756 = vsel %vm1755, %v1748, %v1752
      %v1757 = vand.u32 2147483647, %v1390
      %vm1758 = vcmp.eq.f32.partialorder %v1757, 8.507059e+37
      %v1759 = vand.u32 %v1390, 2147483648
      %v1760 = vor.u32 1.1754944e-38, %v1759
      %v1761 = vsel %vm1758, %v1760, %v1756
      %v1762 = vmul.f32 %v1302, %v1761
      %v1763 = vrcp.pop %v1393
      %v1764 = vmul.f32 %v1393, %v1763
      %v1765 = vsub.f32 1.0, %v1764
      %v1766 = vmul.f32 %v1763, %v1765
      %v1767 = vadd.f32 %v1763, %v1766
      %vm1768 = vweird.f32 %v1393
      %vm1769 = vweird.f32 %v1763
      %vm1770 = vmor %vm1768, %vm1769
      %v1771 = vsel %vm1770, %v1763, %v1767
      %v1772 = vand.u32 2147483647, %v1393
      %vm1773 = vcmp.eq.f32.partialorder %v1772, 8.507059e+37
      %v1774 = vand.u32 %v1393, 2147483648
      %v1775 = vor.u32 1.1754944e-38, %v1774
      %v1776 = vsel %vm1773, %v1775, %v1771
      %v1777 = vmul.f32 %v1304, %v1776
      %v1778 = vrcp.pop %v1396
      %v1779 = vmul.f32 %v1396, %v1778
      %v1780 = vsub.f32 1.0, %v1779
      %v1781 = vmul.f32 %v1778, %v1780
      %v1782 = vadd.f32 %v1778, %v1781
      %vm1783 = vweird.f32 %v1396
      %vm1784 = vweird.f32 %v1778
      %vm1785 = vmor %vm1783, %vm1784
      %v1786 = vsel %vm1785, %v1778, %v1782
      %v1787 = vand.u32 2147483647, %v1396
      %vm1788 = vcmp.eq.f32.partialorder %v1787, 8.507059e+37
      %v1789 = vand.u32 %v1396, 2147483648
      %v1790 = vor.u32 1.1754944e-38, %v1789
      %v1791 = vsel %vm1788, %v1790, %v1786
      %v1792 = vmul.f32 %v1306, %v1791
      %v1793 = vrcp.pop %v1399
      %v1794 = vmul.f32 %v1399, %v1793
      %v1795 = vsub.f32 1.0, %v1794
      %v1796 = vmul.f32 %v1793, %v1795
      %v1797 = vadd.f32 %v1793, %v1796
      %vm1798 = vweird.f32 %v1399
      %vm1799 = vweird.f32 %v1793
      %vm1800 = vmor %vm1798, %vm1799
      %v1801 = vsel %vm1800, %v1793, %v1797
      %v1802 = vand.u32 2147483647, %v1399
      %vm1803 = vcmp.eq.f32.partialorder %v1802, 8.507059e+37
      %v1804 = vand.u32 %v1399, 2147483648
      %v1805 = vor.u32 1.1754944e-38, %v1804
      %v1806 = vsel %vm1803, %v1805, %v1801
      %v1807 = vmul.f32 %v1308, %v1806
      %v1808 = vrcp.pop %v1402
      %v1809 = vmul.f32 %v1402, %v1808
      %v1810 = vsub.f32 1.0, %v1809
      %v1811 = vmul.f32 %v1808, %v1810
      %v1812 = vadd.f32 %v1808, %v1811
      %vm1813 = vweird.f32 %v1402
      %vm1814 = vweird.f32 %v1808
      %vm1815 = vmor %vm1813, %vm1814
      %v1816 = vsel %vm1815, %v1808, %v1812
      %v1817 = vand.u32 2147483647, %v1402
      %vm1818 = vcmp.eq.f32.partialorder %v1817, 8.507059e+37
      %v1819 = vand.u32 %v1402, 2147483648
      %v1820 = vor.u32 1.1754944e-38, %v1819
      %v1821 = vsel %vm1818, %v1820, %v1816
      %v1822 = vmul.f32 %v1310, %v1821
      %v1823 = vrcp.pop %v1405
      %v1824 = vmul.f32 %v1405, %v1823
      %v1825 = vsub.f32 1.0, %v1824
      %v1826 = vmul.f32 %v1823, %v1825
      %v1827 = vadd.f32 %v1823, %v1826
      %vm1828 = vweird.f32 %v1405
      %vm1829 = vweird.f32 %v1823
      %vm1830 = vmor %vm1828, %vm1829
      %v1831 = vsel %vm1830, %v1823, %v1827
      %v1832 = vand.u32 2147483647, %v1405
      %vm1833 = vcmp.eq.f32.partialorder %v1832, 8.507059e+37
      %v1834 = vand.u32 %v1405, 2147483648
      %v1835 = vor.u32 1.1754944e-38, %v1834
      %v1836 = vsel %vm1833, %v1835, %v1831
      %v1837 = vmul.f32 %v1312, %v1836
      %v1838 = vrcp.pop %v1408
      %v1839 = vmul.f32 %v1408, %v1838
      %v1840 = vsub.f32 1.0, %v1839
      %v1841 = vmul.f32 %v1838, %v1840
      %v1842 = vadd.f32 %v1838, %v1841
      %vm1843 = vweird.f32 %v1408
      %vm1844 = vweird.f32 %v1838
      %vm1845 = vmor %vm1843, %vm1844
      %v1846 = vsel %vm1845, %v1838, %v1842
      %v1847 = vand.u32 2147483647, %v1408
      %vm1848 = vcmp.eq.f32.partialorder %v1847, 8.507059e+37
      %v1849 = vand.u32 %v1408, 2147483648
      %v1850 = vor.u32 1.1754944e-38, %v1849
      %v1851 = vsel %vm1848, %v1850, %v1846
      %v1852 = vmul.f32 %v1314, %v1851
      %v1853 = vrcp.pop %v1411
      %v1854 = vmul.f32 %v1411, %v1853
      %v1855 = vsub.f32 1.0, %v1854
      %v1856 = vmul.f32 %v1853, %v1855
      %v1857 = vadd.f32 %v1853, %v1856
      %vm1858 = vweird.f32 %v1411
      %vm1859 = vweird.f32 %v1853
      %vm1860 = vmor %vm1858, %vm1859
      %v1861 = vsel %vm1860, %v1853, %v1857
      %v1862 = vand.u32 2147483647, %v1411
      %vm1863 = vcmp.eq.f32.partialorder %v1862, 8.507059e+37
      %v1864 = vand.u32 %v1411, 2147483648
      %v1865 = vor.u32 1.1754944e-38, %v1864
      %v1866 = vsel %vm1863, %v1865, %v1861
      %v1867 = vmul.f32 %v1316, %v1866
      %v1868 = vrcp.pop %v1414
      %v1869 = vmul.f32 %v1414, %v1868
      %v1870 = vsub.f32 1.0, %v1869
      %v1871 = vmul.f32 %v1868, %v1870
      %v1872 = vadd.f32 %v1868, %v1871
      %vm1873 = vweird.f32 %v1414
      %vm1874 = vweird.f32 %v1868
      %vm1875 = vmor %vm1873, %vm1874
      %v1876 = vsel %vm1875, %v1868, %v1872
      %v1877 = vand.u32 2147483647, %v1414
      %vm1878 = vcmp.eq.f32.partialorder %v1877, 8.507059e+37
      %v1879 = vand.u32 %v1414, 2147483648
      %v1880 = vor.u32 1.1754944e-38, %v1879
      %v1881 = vsel %vm1878, %v1880, %v1876
      %v1882 = vmul.f32 %v1318, %v1881
      %v1883 = vrcp.pop %v1417
      %v1884 = vmul.f32 %v1417, %v1883
      %v1885 = vsub.f32 1.0, %v1884
      %v1886 = vmul.f32 %v1883, %v1885
      %v1887 = vadd.f32 %v1883, %v1886
      %vm1888 = vweird.f32 %v1417
      %vm1889 = vweird.f32 %v1883
      %vm1890 = vmor %vm1888, %vm1889
      %v1891 = vsel %vm1890, %v1883, %v1887
      %v1892 = vand.u32 2147483647, %v1417
      %vm1893 = vcmp.eq.f32.partialorder %v1892, 8.507059e+37
      %v1894 = vand.u32 %v1417, 2147483648
      %v1895 = vor.u32 1.1754944e-38, %v1894
      %v1896 = vsel %vm1893, %v1895, %v1891
      %v1897 = vmul.f32 %v1320, %v1896
      %v1898 = vld [vmem:[%s4] sm:$0xff]
      %v1899 = vld [vmem:[%s4 + $0x8] sm:$0xff]
      %v1901 = vsel %vm1321, %v1432, 0
      %v1904 = vsel %vm1321, %v1447, 0
      %v1907 = vsel %vm1321, %v1462, 0
      %v1910 = vsel %vm1321, %v1477, 0
      %v1913 = vsel %vm1321, %v1492, 0
      %v1916 = vsel %vm1321, %v1507, 0
      %v1919 = vsel %vm1321, %v1522, 0
      %v1922 = vsel %vm1321, %v1537, 0
      %v1925 = vsel %vm1321, %v1552, 0
      %v1928 = vsel %vm1321, %v1567, 0
      %v1931 = vsel %vm1321, %v1582, 0
      %v1934 = vsel %vm1321, %v1597, 0
      %v1937 = vsel %vm1321, %v1612, 0
      %v1940 = vsel %vm1321, %v1627, 0
      %v1943 = vsel %vm1321, %v1642, 0
      %v1946 = vsel %vm1321, %v1657, 0
      %v1949 = vsel %vm1321, %v1672, 0
      %v1952 = vsel %vm1321, %v1687, 0
      %v1955 = vsel %vm1321, %v1702, 0
      %v1958 = vsel %vm1321, %v1717, 0
      %v1961 = vsel %vm1321, %v1732, 0
      %v1964 = vsel %vm1321, %v1747, 0
      %v1967 = vsel %vm1321, %v1762, 0
      %v1970 = vsel %vm1321, %v1777, 0
      %v1973 = vsel %vm1321, %v1792, 0
      %v1976 = vsel %vm1321, %v1807, 0
      %v1979 = vsel %vm1321, %v1822, 0
      %v1982 = vsel %vm1321, %v1837, 0
      %v1985 = vsel %vm1321, %v1852, 0
      %v1988 = vsel %vm1321, %v1867, 0
      %v1991 = vsel %vm1321, %v1882, 0
      %v1994 = vsel %vm1321, %v1897, 0
      %1996 = vmatpush.msra.mxu0 0.0
      %1997 = vmatpush.msra.mxu0 0.0
      %1998 = vmatpush.msra.mxu0 0.0
      %1999 = vmatpush.msra.mxu0 0.0
      %2000 = vmatpush.msra.mxu0 0.0
      %2001 = vmatpush.msra.mxu0 0.0
      %2002 = vmatpush.msra.mxu0 0.0
      %2003 = vmatpush.msra.mxu0 0.0
      %2004 = vmatpush.msra.mxu0 0.0
      %2005 = vmatpush.msra.mxu0 0.0
      %2006 = vmatpush.msra.mxu0 0.0
      %2007 = vmatpush.msra.mxu0 0.0
      %2008 = vmatpush.msra.mxu0 0.0
      %2009 = vmatpush.msra.mxu0 0.0
      %2010 = vmatpush.msra.mxu0 %v1899
      %2011 = vmatpush.msra.mxu0 %v1898
      %2012 = vmatmul.f32.gmra.mxu0 %v1901
      %v2013 = vpop.f32.mrf.mxu0
      %v2014 = vadd.f32 0.0, %v2013
      %2015 = vmatmul.f32.gmra.mxu0 %v1904
      %v2016 = vpop.f32.mrf.mxu0
      %v2017 = vadd.f32 0.0, %v2016
      %2018 = vmatmul.f32.gmra.mxu0 %v1907
      %v2019 = vpop.f32.mrf.mxu0
      %v2020 = vadd.f32 0.0, %v2019
      %2021 = vmatmul.f32.gmra.mxu0 %v1910
      %v2022 = vpop.f32.mrf.mxu0
      %v2023 = vadd.f32 0.0, %v2022
      %2024 = vmatmul.f32.gmra.mxu0 %v1913
      %v2025 = vpop.f32.mrf.mxu0
      %v2026 = vadd.f32 0.0, %v2025
      %2027 = vmatmul.f32.gmra.mxu0 %v1916
      %v2028 = vpop.f32.mrf.mxu0
      %v2029 = vadd.f32 0.0, %v2028
      %2030 = vmatmul.f32.gmra.mxu0 %v1919
      %v2031 = vpop.f32.mrf.mxu0
      %v2032 = vadd.f32 0.0, %v2031
      %2033 = vmatmul.f32.gmra.mxu0 %v1922
      %v2034 = vpop.f32.mrf.mxu0
      %v2035 = vadd.f32 0.0, %v2034
      %2036 = vmatmul.f32.gmra.mxu0 %v1925
      %v2037 = vpop.f32.mrf.mxu0
      %v2038 = vadd.f32 0.0, %v2037
      %2039 = vmatmul.f32.gmra.mxu0 %v1928
      %v2040 = vpop.f32.mrf.mxu0
      %v2041 = vadd.f32 0.0, %v2040
      %2042 = vmatmul.f32.gmra.mxu0 %v1931
      %v2043 = vpop.f32.mrf.mxu0
      %v2044 = vadd.f32 0.0, %v2043
      %2045 = vmatmul.f32.gmra.mxu0 %v1934
      %v2046 = vpop.f32.mrf.mxu0
      %v2047 = vadd.f32 0.0, %v2046
      %2048 = vmatmul.f32.gmra.mxu0 %v1937
      %v2049 = vpop.f32.mrf.mxu0
      %v2050 = vadd.f32 0.0, %v2049
      %2051 = vmatmul.f32.gmra.mxu0 %v1940
      %v2052 = vpop.f32.mrf.mxu0
      %v2053 = vadd.f32 0.0, %v2052
      %2054 = vmatmul.f32.gmra.mxu0 %v1943
      %v2055 = vpop.f32.mrf.mxu0
      %v2056 = vadd.f32 0.0, %v2055
      %2057 = vmatmul.f32.gmra.mxu0 %v1946
      %v2058 = vpop.f32.mrf.mxu0
      %v2059 = vadd.f32 0.0, %v2058
      %2060 = vmatmul.f32.gmra.mxu0 %v1949
      %v2061 = vpop.f32.mrf.mxu0
      %v2062 = vadd.f32 0.0, %v2061
      %2063 = vmatmul.f32.gmra.mxu0 %v1952
      %v2064 = vpop.f32.mrf.mxu0
      %v2065 = vadd.f32 0.0, %v2064
      %2066 = vmatmul.f32.gmra.mxu0 %v1955
      %v2067 = vpop.f32.mrf.mxu0
      %v2068 = vadd.f32 0.0, %v2067
      %2069 = vmatmul.f32.gmra.mxu0 %v1958
      %v2070 = vpop.f32.mrf.mxu0
      %v2071 = vadd.f32 0.0, %v2070
      %2072 = vmatmul.f32.gmra.mxu0 %v1961
      %v2073 = vpop.f32.mrf.mxu0
      %v2074 = vadd.f32 0.0, %v2073
      %2075 = vmatmul.f32.gmra.mxu0 %v1964
      %v2076 = vpop.f32.mrf.mxu0
      %v2077 = vadd.f32 0.0, %v2076
      %2078 = vmatmul.f32.gmra.mxu0 %v1967
      %v2079 = vpop.f32.mrf.mxu0
      %v2080 = vadd.f32 0.0, %v2079
      %2081 = vmatmul.f32.gmra.mxu0 %v1970
      %v2082 = vpop.f32.mrf.mxu0
      %v2083 = vadd.f32 0.0, %v2082
      %2084 = vmatmul.f32.gmra.mxu0 %v1973
      %v2085 = vpop.f32.mrf.mxu0
      %v2086 = vadd.f32 0.0, %v2085
      %2087 = vmatmul.f32.gmra.mxu0 %v1976
      %v2088 = vpop.f32.mrf.mxu0
      %v2089 = vadd.f32 0.0, %v2088
      %2090 = vmatmul.f32.gmra.mxu0 %v1979
      %v2091 = vpop.f32.mrf.mxu0
      %v2092 = vadd.f32 0.0, %v2091
      %2093 = vmatmul.f32.gmra.mxu0 %v1982
      %v2094 = vpop.f32.mrf.mxu0
      %v2095 = vadd.f32 0.0, %v2094
      %2096 = vmatmul.f32.gmra.mxu0 %v1985
      %v2097 = vpop.f32.mrf.mxu0
      %v2098 = vadd.f32 0.0, %v2097
      %2099 = vmatmul.f32.gmra.mxu0 %v1988
      %v2100 = vpop.f32.mrf.mxu0
      %v2101 = vadd.f32 0.0, %v2100
      %2102 = vmatmul.f32.gmra.mxu0 %v1991
      %v2103 = vpop.f32.mrf.mxu0
      %v2104 = vadd.f32 0.0, %v2103
      %2105 = vmatmul.f32.gmra.mxu0 %v1994
      %v2106 = vpop.f32.mrf.mxu0
      %v2107 = vadd.f32 0.0, %v2106
      %2108 = vdwg.mxu0
      %v2109 = vsel %vm322, %v2014, 0.0
      %2110 = vadd.xlane.f32.xlu0 %v2109
      %v2111 = vpop.xlane.xlu0 %2110
      %v2112 = vsel %vm322, %v2017, 0.0
      %2113 = vadd.xlane.f32.xlu0 %v2112
      %v2114 = vpop.xlane.xlu0 %2113
      %v2115 = vsel %vm322, %v2020, 0.0
      %2116 = vadd.xlane.f32.xlu0 %v2115
      %v2117 = vpop.xlane.xlu0 %2116
      %v2118 = vsel %vm322, %v2023, 0.0
      %2119 = vadd.xlane.f32.xlu0 %v2118
      %v2120 = vpop.xlane.xlu0 %2119
      %v2121 = vsel %vm322, %v2026, 0.0
      %2122 = vadd.xlane.f32.xlu0 %v2121
      %v2123 = vpop.xlane.xlu0 %2122
      %v2124 = vsel %vm322, %v2029, 0.0
      %2125 = vadd.xlane.f32.xlu0 %v2124
      %v2126 = vpop.xlane.xlu0 %2125
      %v2127 = vsel %vm322, %v2032, 0.0
      %2128 = vadd.xlane.f32.xlu0 %v2127
      %v2129 = vpop.xlane.xlu0 %2128
      %v2130 = vsel %vm322, %v2035, 0.0
      %2131 = vadd.xlane.f32.xlu0 %v2130
      %v2132 = vpop.xlane.xlu0 %2131
      %v2133 = vsel %vm322, %v2038, 0.0
      %2134 = vadd.xlane.f32.xlu0 %v2133
      %v2135 = vpop.xlane.xlu0 %2134
      %v2136 = vsel %vm322, %v2041, 0.0
      %2137 = vadd.xlane.f32.xlu0 %v2136
      %v2138 = vpop.xlane.xlu0 %2137
      %v2139 = vsel %vm322, %v2044, 0.0
      %2140 = vadd.xlane.f32.xlu0 %v2139
      %v2141 = vpop.xlane.xlu0 %2140
      %v2142 = vsel %vm322, %v2047, 0.0
      %2143 = vadd.xlane.f32.xlu0 %v2142
      %v2144 = vpop.xlane.xlu0 %2143
      %v2145 = vsel %vm322, %v2050, 0.0
      %2146 = vadd.xlane.f32.xlu0 %v2145
      %v2147 = vpop.xlane.xlu0 %2146
      %v2148 = vsel %vm322, %v2053, 0.0
      %2149 = vadd.xlane.f32.xlu0 %v2148
      %v2150 = vpop.xlane.xlu0 %2149
      %v2151 = vsel %vm322, %v2056, 0.0
      %2152 = vadd.xlane.f32.xlu0 %v2151
      %v2153 = vpop.xlane.xlu0 %2152
      %v2154 = vsel %vm322, %v2059, 0.0
      %2155 = vadd.xlane.f32.xlu0 %v2154
      %v2156 = vpop.xlane.xlu0 %2155
      %v2157 = vsel %vm322, %v2062, 0.0
      %2158 = vadd.xlane.f32.xlu0 %v2157
      %v2159 = vpop.xlane.xlu0 %2158
      %v2160 = vsel %vm322, %v2065, 0.0
      %2161 = vadd.xlane.f32.xlu0 %v2160
      %v2162 = vpop.xlane.xlu0 %2161
      %v2163 = vsel %vm322, %v2068, 0.0
      %2164 = vadd.xlane.f32.xlu0 %v2163
      %v2165 = vpop.xlane.xlu0 %2164
      %v2166 = vsel %vm322, %v2071, 0.0
      %2167 = vadd.xlane.f32.xlu0 %v2166
      %v2168 = vpop.xlane.xlu0 %2167
      %v2169 = vsel %vm322, %v2074, 0.0
      %2170 = vadd.xlane.f32.xlu0 %v2169
      %v2171 = vpop.xlane.xlu0 %2170
      %v2172 = vsel %vm322, %v2077, 0.0
      %2173 = vadd.xlane.f32.xlu0 %v2172
      %v2174 = vpop.xlane.xlu0 %2173
      %v2175 = vsel %vm322, %v2080, 0.0
      %2176 = vadd.xlane.f32.xlu0 %v2175
      %v2177 = vpop.xlane.xlu0 %2176
      %v2178 = vsel %vm322, %v2083, 0.0
      %2179 = vadd.xlane.f32.xlu0 %v2178
      %v2180 = vpop.xlane.xlu0 %2179
      %v2181 = vsel %vm322, %v2086, 0.0
      %2182 = vadd.xlane.f32.xlu0 %v2181
      %v2183 = vpop.xlane.xlu0 %2182
      %v2184 = vsel %vm322, %v2089, 0.0
      %2185 = vadd.xlane.f32.xlu0 %v2184
      %v2186 = vpop.xlane.xlu0 %2185
      %v2187 = vsel %vm322, %v2092, 0.0
      %2188 = vadd.xlane.f32.xlu0 %v2187
      %v2189 = vpop.xlane.xlu0 %2188
      %v2190 = vsel %vm322, %v2095, 0.0
      %2191 = vadd.xlane.f32.xlu0 %v2190
      %v2192 = vpop.xlane.xlu0 %2191
      %v2193 = vsel %vm322, %v2098, 0.0
      %2194 = vadd.xlane.f32.xlu0 %v2193
      %v2195 = vpop.xlane.xlu0 %2194
      %v2196 = vsel %vm322, %v2101, 0.0
      %2197 = vadd.xlane.f32.xlu0 %v2196
      %v2198 = vpop.xlane.xlu0 %2197
      %v2199 = vsel %vm322, %v2104, 0.0
      %2200 = vadd.xlane.f32.xlu0 %v2199
      %v2201 = vpop.xlane.xlu0 %2200
      %v2202 = vsel %vm322, %v2107, 0.0
      %2203 = vadd.xlane.f32.xlu0 %v2202
      %v2204 = vpop.xlane.xlu0 %2203
      %v2205 = vmul.f32 %v2111, 0.03125
      %v2206 = vmul.f32 %v2114, 0.03125
      %v2207 = vmul.f32 %v2117, 0.03125
      %v2208 = vmul.f32 %v2120, 0.03125
      %v2209 = vmul.f32 %v2123, 0.03125
      %v2210 = vmul.f32 %v2126, 0.03125
      %v2211 = vmul.f32 %v2129, 0.03125
      %v2212 = vmul.f32 %v2132, 0.03125
      %v2213 = vmul.f32 %v2135, 0.03125
      %v2214 = vmul.f32 %v2138, 0.03125
      %v2215 = vmul.f32 %v2141, 0.03125
      %v2216 = vmul.f32 %v2144, 0.03125
      %v2217 = vmul.f32 %v2147, 0.03125
      %v2218 = vmul.f32 %v2150, 0.03125
      %v2219 = vmul.f32 %v2153, 0.03125
      %v2220 = vmul.f32 %v2156, 0.03125
      %v2221 = vmul.f32 %v2159, 0.03125
      %v2222 = vmul.f32 %v2162, 0.03125
      %v2223 = vmul.f32 %v2165, 0.03125
      %v2224 = vmul.f32 %v2168, 0.03125
      %v2225 = vmul.f32 %v2171, 0.03125
      %v2226 = vmul.f32 %v2174, 0.03125
      %v2227 = vmul.f32 %v2177, 0.03125
      %v2228 = vmul.f32 %v2180, 0.03125
      %v2229 = vmul.f32 %v2183, 0.03125
      %v2230 = vmul.f32 %v2186, 0.03125
      %v2231 = vmul.f32 %v2189, 0.03125
      %v2232 = vmul.f32 %v2192, 0.03125
      %v2233 = vmul.f32 %v2195, 0.03125
      %v2234 = vmul.f32 %v2198, 0.03125
      %v2235 = vmul.f32 %v2201, 0.03125
      %v2236 = vmul.f32 %v2204, 0.03125
      %v2237 = vmul.f32 %v2014, %v2014
      %v2238 = vmul.f32 %v2017, %v2017
      %v2239 = vmul.f32 %v2020, %v2020
      %v2240 = vmul.f32 %v2023, %v2023
      %v2241 = vmul.f32 %v2026, %v2026
      %v2242 = vmul.f32 %v2029, %v2029
      %v2243 = vmul.f32 %v2032, %v2032
      %v2244 = vmul.f32 %v2035, %v2035
      %v2245 = vmul.f32 %v2038, %v2038
      %v2246 = vmul.f32 %v2041, %v2041
      %v2247 = vmul.f32 %v2044, %v2044
      %v2248 = vmul.f32 %v2047, %v2047
      %v2249 = vmul.f32 %v2050, %v2050
      %v2250 = vmul.f32 %v2053, %v2053
      %v2251 = vmul.f32 %v2056, %v2056
      %v2252 = vmul.f32 %v2059, %v2059
      %v2253 = vmul.f32 %v2062, %v2062
      %v2254 = vmul.f32 %v2065, %v2065
      %v2255 = vmul.f32 %v2068, %v2068
      %v2256 = vmul.f32 %v2071, %v2071
      %v2257 = vmul.f32 %v2074, %v2074
      %v2258 = vmul.f32 %v2077, %v2077
      %v2259 = vmul.f32 %v2080, %v2080
      %v2260 = vmul.f32 %v2083, %v2083
      %v2261 = vmul.f32 %v2086, %v2086
      %v2262 = vmul.f32 %v2089, %v2089
      %v2263 = vmul.f32 %v2092, %v2092
      %v2264 = vmul.f32 %v2095, %v2095
      %v2265 = vmul.f32 %v2098, %v2098
      %v2266 = vmul.f32 %v2101, %v2101
      %v2267 = vmul.f32 %v2104, %v2104
      %v2268 = vmul.f32 %v2107, %v2107
      %v2269 = vsel %vm322, %v2237, 0.0
      %2270 = vadd.xlane.f32.xlu0 %v2269
      %v2271 = vpop.xlane.xlu0 %2270
      %v2272 = vsel %vm322, %v2238, 0.0
      %2273 = vadd.xlane.f32.xlu0 %v2272
      %v2274 = vpop.xlane.xlu0 %2273
      %v2275 = vsel %vm322, %v2239, 0.0
      %2276 = vadd.xlane.f32.xlu0 %v2275
      %v2277 = vpop.xlane.xlu0 %2276
      %v2278 = vsel %vm322, %v2240, 0.0
      %2279 = vadd.xlane.f32.xlu0 %v2278
      %v2280 = vpop.xlane.xlu0 %2279
      %v2281 = vsel %vm322, %v2241, 0.0
      %2282 = vadd.xlane.f32.xlu0 %v2281
      %v2283 = vpop.xlane.xlu0 %2282
      %v2284 = vsel %vm322, %v2242, 0.0
      %2285 = vadd.xlane.f32.xlu0 %v2284
      %v2286 = vpop.xlane.xlu0 %2285
      %v2287 = vsel %vm322, %v2243, 0.0
      %2288 = vadd.xlane.f32.xlu0 %v2287
      %v2289 = vpop.xlane.xlu0 %2288
      %v2290 = vsel %vm322, %v2244, 0.0
      %2291 = vadd.xlane.f32.xlu0 %v2290
      %v2292 = vpop.xlane.xlu0 %2291
      %v2293 = vsel %vm322, %v2245, 0.0
      %2294 = vadd.xlane.f32.xlu0 %v2293
      %v2295 = vpop.xlane.xlu0 %2294
      %v2296 = vsel %vm322, %v2246, 0.0
      %2297 = vadd.xlane.f32.xlu0 %v2296
      %v2298 = vpop.xlane.xlu0 %2297
      %v2299 = vsel %vm322, %v2247, 0.0
      %2300 = vadd.xlane.f32.xlu0 %v2299
      %v2301 = vpop.xlane.xlu0 %2300
      %v2302 = vsel %vm322, %v2248, 0.0
      %2303 = vadd.xlane.f32.xlu0 %v2302
      %v2304 = vpop.xlane.xlu0 %2303
      %v2305 = vsel %vm322, %v2249, 0.0
      %2306 = vadd.xlane.f32.xlu0 %v2305
      %v2307 = vpop.xlane.xlu0 %2306
      %v2308 = vsel %vm322, %v2250, 0.0
      %2309 = vadd.xlane.f32.xlu0 %v2308
      %v2310 = vpop.xlane.xlu0 %2309
      %v2311 = vsel %vm322, %v2251, 0.0
      %2312 = vadd.xlane.f32.xlu0 %v2311
      %v2313 = vpop.xlane.xlu0 %2312
      %v2314 = vsel %vm322, %v2252, 0.0
      %2315 = vadd.xlane.f32.xlu0 %v2314
      %v2316 = vpop.xlane.xlu0 %2315
      %v2317 = vsel %vm322, %v2253, 0.0
      %2318 = vadd.xlane.f32.xlu0 %v2317
      %v2319 = vpop.xlane.xlu0 %2318
      %v2320 = vsel %vm322, %v2254, 0.0
      %2321 = vadd.xlane.f32.xlu0 %v2320
      %v2322 = vpop.xlane.xlu0 %2321
      %v2323 = vsel %vm322, %v2255, 0.0
      %2324 = vadd.xlane.f32.xlu0 %v2323
      %v2325 = vpop.xlane.xlu0 %2324
      %v2326 = vsel %vm322, %v2256, 0.0
      %2327 = vadd.xlane.f32.xlu0 %v2326
      %v2328 = vpop.xlane.xlu0 %2327
      %v2329 = vsel %vm322, %v2257, 0.0
      %2330 = vadd.xlane.f32.xlu0 %v2329
      %v2331 = vpop.xlane.xlu0 %2330
      %v2332 = vsel %vm322, %v2258, 0.0
      %2333 = vadd.xlane.f32.xlu0 %v2332
      %v2334 = vpop.xlane.xlu0 %2333
      %v2335 = vsel %vm322, %v2259, 0.0
      %2336 = vadd.xlane.f32.xlu0 %v2335
      %v2337 = vpop.xlane.xlu0 %2336
      %v2338 = vsel %vm322, %v2260, 0.0
      %2339 = vadd.xlane.f32.xlu0 %v2338
      %v2340 = vpop.xlane.xlu0 %2339
      %v2341 = vsel %vm322, %v2261, 0.0
      %2342 = vadd.xlane.f32.xlu0 %v2341
      %v2343 = vpop.xlane.xlu0 %2342
      %v2344 = vsel %vm322, %v2262, 0.0
      %2345 = vadd.xlane.f32.xlu0 %v2344
      %v2346 = vpop.xlane.xlu0 %2345
      %v2347 = vsel %vm322, %v2263, 0.0
      %2348 = vadd.xlane.f32.xlu0 %v2347
      %v2349 = vpop.xlane.xlu0 %2348
      %v2350 = vsel %vm322, %v2264, 0.0
      %2351 = vadd.xlane.f32.xlu0 %v2350
      %v2352 = vpop.xlane.xlu0 %2351
      %v2353 = vsel %vm322, %v2265, 0.0
      %2354 = vadd.xlane.f32.xlu0 %v2353
      %v2355 = vpop.xlane.xlu0 %2354
      %v2356 = vsel %vm322, %v2266, 0.0
      %2357 = vadd.xlane.f32.xlu0 %v2356
      %v2358 = vpop.xlane.xlu0 %2357
      %v2359 = vsel %vm322, %v2267, 0.0
      %2360 = vadd.xlane.f32.xlu0 %v2359
      %v2361 = vpop.xlane.xlu0 %2360
      %v2362 = vsel %vm322, %v2268, 0.0
      %2363 = vadd.xlane.f32.xlu0 %v2362
      %v2364 = vpop.xlane.xlu0 %2363
      %v2365 = vmul.f32 %v2271, 0.03125
      %v2366 = vmul.f32 %v2274, 0.03125
      %v2367 = vmul.f32 %v2277, 0.03125
      %v2368 = vmul.f32 %v2280, 0.03125
      %v2369 = vmul.f32 %v2283, 0.03125
      %v2370 = vmul.f32 %v2286, 0.03125
      %v2371 = vmul.f32 %v2289, 0.03125
      %v2372 = vmul.f32 %v2292, 0.03125
      %v2373 = vmul.f32 %v2295, 0.03125
      %v2374 = vmul.f32 %v2298, 0.03125
      %v2375 = vmul.f32 %v2301, 0.03125
      %v2376 = vmul.f32 %v2304, 0.03125
      %v2377 = vmul.f32 %v2307, 0.03125
      %v2378 = vmul.f32 %v2310, 0.03125
      %v2379 = vmul.f32 %v2313, 0.03125
      %v2380 = vmul.f32 %v2316, 0.03125
      %v2381 = vmul.f32 %v2319, 0.03125
      %v2382 = vmul.f32 %v2322, 0.03125
      %v2383 = vmul.f32 %v2325, 0.03125
      %v2384 = vmul.f32 %v2328, 0.03125
      %v2385 = vmul.f32 %v2331, 0.03125
      %v2386 = vmul.f32 %v2334, 0.03125
      %v2387 = vmul.f32 %v2337, 0.03125
      %v2388 = vmul.f32 %v2340, 0.03125
      %v2389 = vmul.f32 %v2343, 0.03125
      %v2390 = vmul.f32 %v2346, 0.03125
      %v2391 = vmul.f32 %v2349, 0.03125
      %v2392 = vmul.f32 %v2352, 0.03125
      %v2393 = vmul.f32 %v2355, 0.03125
      %v2394 = vmul.f32 %v2358, 0.03125
      %v2395 = vmul.f32 %v2361, 0.03125
      %v2396 = vmul.f32 %v2364, 0.03125
      %v2397 = vmul.f32 %v2205, %v2205
      %v2398 = vmul.f32 %v2206, %v2206
      %v2399 = vmul.f32 %v2207, %v2207
      %v2400 = vmul.f32 %v2208, %v2208
      %v2401 = vmul.f32 %v2209, %v2209
      %v2402 = vmul.f32 %v2210, %v2210
      %v2403 = vmul.f32 %v2211, %v2211
      %v2404 = vmul.f32 %v2212, %v2212
      %v2405 = vmul.f32 %v2213, %v2213
      %v2406 = vmul.f32 %v2214, %v2214
      %v2407 = vmul.f32 %v2215, %v2215
      %v2408 = vmul.f32 %v2216, %v2216
      %v2409 = vmul.f32 %v2217, %v2217
      %v2410 = vmul.f32 %v2218, %v2218
      %v2411 = vmul.f32 %v2219, %v2219
      %v2412 = vmul.f32 %v2220, %v2220
      %v2413 = vmul.f32 %v2221, %v2221
      %v2414 = vmul.f32 %v2222, %v2222
      %v2415 = vmul.f32 %v2223, %v2223
      %v2416 = vmul.f32 %v2224, %v2224
      %v2417 = vmul.f32 %v2225, %v2225
      %v2418 = vmul.f32 %v2226, %v2226
      %v2419 = vmul.f32 %v2227, %v2227
      %v2420 = vmul.f32 %v2228, %v2228
      %v2421 = vmul.f32 %v2229, %v2229
      %v2422 = vmul.f32 %v2230, %v2230
      %v2423 = vmul.f32 %v2231, %v2231
      %v2424 = vmul.f32 %v2232, %v2232
      %v2425 = vmul.f32 %v2233, %v2233
      %v2426 = vmul.f32 %v2234, %v2234
      %v2427 = vmul.f32 %v2235, %v2235
      %v2428 = vmul.f32 %v2236, %v2236
      %v2429 = vsub.f32 %v2365, %v2397
      %v2430 = vsub.f32 %v2366, %v2398
      %v2431 = vsub.f32 %v2367, %v2399
      %v2432 = vsub.f32 %v2368, %v2400
      %v2433 = vsub.f32 %v2369, %v2401
      %v2434 = vsub.f32 %v2370, %v2402
      %v2435 = vsub.f32 %v2371, %v2403
      %v2436 = vsub.f32 %v2372, %v2404
      %v2437 = vsub.f32 %v2373, %v2405
      %v2438 = vsub.f32 %v2374, %v2406
      %v2439 = vsub.f32 %v2375, %v2407
      %v2440 = vsub.f32 %v2376, %v2408
      %v2441 = vsub.f32 %v2377, %v2409
      %v2442 = vsub.f32 %v2378, %v2410
      %v2443 = vsub.f32 %v2379, %v2411
      %v2444 = vsub.f32 %v2380, %v2412
      %v2445 = vsub.f32 %v2381, %v2413
      %v2446 = vsub.f32 %v2382, %v2414
      %v2447 = vsub.f32 %v2383, %v2415
      %v2448 = vsub.f32 %v2384, %v2416
      %v2449 = vsub.f32 %v2385, %v2417
      %v2450 = vsub.f32 %v2386, %v2418
      %v2451 = vsub.f32 %v2387, %v2419
      %v2452 = vsub.f32 %v2388, %v2420
      %v2453 = vsub.f32 %v2389, %v2421
      %v2454 = vsub.f32 %v2390, %v2422
      %v2455 = vsub.f32 %v2391, %v2423
      %v2456 = vsub.f32 %v2392, %v2424
      %v2457 = vsub.f32 %v2393, %v2425
      %v2458 = vsub.f32 %v2394, %v2426
      %v2459 = vsub.f32 %v2395, %v2427
      %v2460 = vsub.f32 %v2396, %v2428
      %v2461 = vmax.f32 %v2429, 0.0
      %v2462 = vmax.f32 %v2430, 0.0
      %v2463 = vmax.f32 %v2431, 0.0
      %v2464 = vmax.f32 %v2432, 0.0
      %v2465 = vmax.f32 %v2433, 0.0
      %v2466 = vmax.f32 %v2434, 0.0
      %v2467 = vmax.f32 %v2435, 0.0
      %v2468 = vmax.f32 %v2436, 0.0
      %v2469 = vmax.f32 %v2437, 0.0
      %v2470 = vmax.f32 %v2438, 0.0
      %v2471 = vmax.f32 %v2439, 0.0
      %v2472 = vmax.f32 %v2440, 0.0
      %v2473 = vmax.f32 %v2441, 0.0
      %v2474 = vmax.f32 %v2442, 0.0
      %v2475 = vmax.f32 %v2443, 0.0
      %v2476 = vmax.f32 %v2444, 0.0
      %v2477 = vmax.f32 %v2445, 0.0
      %v2478 = vmax.f32 %v2446, 0.0
      %v2479 = vmax.f32 %v2447, 0.0
      %v2480 = vmax.f32 %v2448, 0.0
      %v2481 = vmax.f32 %v2449, 0.0
      %v2482 = vmax.f32 %v2450, 0.0
      %v2483 = vmax.f32 %v2451, 0.0
      %v2484 = vmax.f32 %v2452, 0.0
      %v2485 = vmax.f32 %v2453, 0.0
      %v2486 = vmax.f32 %v2454, 0.0
      %v2487 = vmax.f32 %v2455, 0.0
      %v2488 = vmax.f32 %v2456, 0.0
      %v2489 = vmax.f32 %v2457, 0.0
      %v2490 = vmax.f32 %v2458, 0.0
      %v2491 = vmax.f32 %v2459, 0.0
      %v2492 = vmax.f32 %v2460, 0.0
      %v2493 = vsub.f32 %v2014, %v2205
      %v2494 = vsub.f32 %v2017, %v2206
      %v2495 = vsub.f32 %v2020, %v2207
      %v2496 = vsub.f32 %v2023, %v2208
      %v2497 = vsub.f32 %v2026, %v2209
      %v2498 = vsub.f32 %v2029, %v2210
      %v2499 = vsub.f32 %v2032, %v2211
      %v2500 = vsub.f32 %v2035, %v2212
      %v2501 = vsub.f32 %v2038, %v2213
      %v2502 = vsub.f32 %v2041, %v2214
      %v2503 = vsub.f32 %v2044, %v2215
      %v2504 = vsub.f32 %v2047, %v2216
      %v2505 = vsub.f32 %v2050, %v2217
      %v2506 = vsub.f32 %v2053, %v2218
      %v2507 = vsub.f32 %v2056, %v2219
      %v2508 = vsub.f32 %v2059, %v2220
      %v2509 = vsub.f32 %v2062, %v2221
      %v2510 = vsub.f32 %v2065, %v2222
      %v2511 = vsub.f32 %v2068, %v2223
      %v2512 = vsub.f32 %v2071, %v2224
      %v2513 = vsub.f32 %v2074, %v2225
      %v2514 = vsub.f32 %v2077, %v2226
      %v2515 = vsub.f32 %v2080, %v2227
      %v2516 = vsub.f32 %v2083, %v2228
      %v2517 = vsub.f32 %v2086, %v2229
      %v2518 = vsub.f32 %v2089, %v2230
      %v2519 = vsub.f32 %v2092, %v2231
      %v2520 = vsub.f32 %v2095, %v2232
      %v2521 = vsub.f32 %v2098, %v2233
      %v2522 = vsub.f32 %v2101, %v2234
      %v2523 = vsub.f32 %v2104, %v2235
      %v2524 = vsub.f32 %v2107, %v2236
      %v2525 = vadd.f32 %v2461, 1e-05
      %v2526 = vadd.f32 %v2462, 1e-05
      %v2527 = vadd.f32 %v2463, 1e-05
      %v2528 = vadd.f32 %v2464, 1e-05
      %v2529 = vadd.f32 %v2465, 1e-05
      %v2530 = vadd.f32 %v2466, 1e-05
      %v2531 = vadd.f32 %v2467, 1e-05
      %v2532 = vadd.f32 %v2468, 1e-05
      %v2533 = vadd.f32 %v2469, 1e-05
      %v2534 = vadd.f32 %v2470, 1e-05
      %v2535 = vadd.f32 %v2471, 1e-05
      %v2536 = vadd.f32 %v2472, 1e-05
      %v2537 = vadd.f32 %v2473, 1e-05
      %v2538 = vadd.f32 %v2474, 1e-05
      %v2539 = vadd.f32 %v2475, 1e-05
      %v2540 = vadd.f32 %v2476, 1e-05
      %v2541 = vadd.f32 %v2477, 1e-05
      %v2542 = vadd.f32 %v2478, 1e-05
      %v2543 = vadd.f32 %v2479, 1e-05
      %v2544 = vadd.f32 %v2480, 1e-05
      %v2545 = vadd.f32 %v2481, 1e-05
      %v2546 = vadd.f32 %v2482, 1e-05
      %v2547 = vadd.f32 %v2483, 1e-05
      %v2548 = vadd.f32 %v2484, 1e-05
      %v2549 = vadd.f32 %v2485, 1e-05
      %v2550 = vadd.f32 %v2486, 1e-05
      %v2551 = vadd.f32 %v2487, 1e-05
      %v2552 = vadd.f32 %v2488, 1e-05
      %v2553 = vadd.f32 %v2489, 1e-05
      %v2554 = vadd.f32 %v2490, 1e-05
      %v2555 = vadd.f32 %v2491, 1e-05
      %v2556 = vadd.f32 %v2492, 1e-05
      %v2557 = vrsqrt.pop %v2525
      %v2558 = vmul.f32 %v2557, %v2525
      %v2559 = vmul.f32 %v2558, %v2557
      %v2560 = vmul.f32 0.5, %v2559
      %v2561 = vsub.f32 1.5, %v2560
      %v2562 = vmul.f32 %v2557, %v2561
      %vm2563 = vweird.f32 %v2525
      %vm2564 = vweird.f32 %v2557
      %vm2565 = vmor %vm2563, %vm2564
      %v2566 = vsel %vm2565, %v2557, %v2562
      %v2567 = vrsqrt.pop %v2526
      %v2568 = vmul.f32 %v2567, %v2526
      %v2569 = vmul.f32 %v2568, %v2567
      %v2570 = vmul.f32 0.5, %v2569
      %v2571 = vsub.f32 1.5, %v2570
      %v2572 = vmul.f32 %v2567, %v2571
      %vm2573 = vweird.f32 %v2526
      %vm2574 = vweird.f32 %v2567
      %vm2575 = vmor %vm2573, %vm2574
      %v2576 = vsel %vm2575, %v2567, %v2572
      %v2577 = vrsqrt.pop %v2527
      %v2578 = vmul.f32 %v2577, %v2527
      %v2579 = vmul.f32 %v2578, %v2577
      %v2580 = vmul.f32 0.5, %v2579
      %v2581 = vsub.f32 1.5, %v2580
      %v2582 = vmul.f32 %v2577, %v2581
      %vm2583 = vweird.f32 %v2527
      %vm2584 = vweird.f32 %v2577
      %vm2585 = vmor %vm2583, %vm2584
      %v2586 = vsel %vm2585, %v2577, %v2582
      %v2587 = vrsqrt.pop %v2528
      %v2588 = vmul.f32 %v2587, %v2528
      %v2589 = vmul.f32 %v2588, %v2587
      %v2590 = vmul.f32 0.5, %v2589
      %v2591 = vsub.f32 1.5, %v2590
      %v2592 = vmul.f32 %v2587, %v2591
      %vm2593 = vweird.f32 %v2528
      %vm2594 = vweird.f32 %v2587
      %vm2595 = vmor %vm2593, %vm2594
      %v2596 = vsel %vm2595, %v2587, %v2592
      %v2597 = vrsqrt.pop %v2529
      %v2598 = vmul.f32 %v2597, %v2529
      %v2599 = vmul.f32 %v2598, %v2597
      %v2600 = vmul.f32 0.5, %v2599
      %v2601 = vsub.f32 1.5, %v2600
      %v2602 = vmul.f32 %v2597, %v2601
      %vm2603 = vweird.f32 %v2529
      %vm2604 = vweird.f32 %v2597
      %vm2605 = vmor %vm2603, %vm2604
      %v2606 = vsel %vm2605, %v2597, %v2602
      %v2607 = vrsqrt.pop %v2530
      %v2608 = vmul.f32 %v2607, %v2530
      %v2609 = vmul.f32 %v2608, %v2607
      %v2610 = vmul.f32 0.5, %v2609
      %v2611 = vsub.f32 1.5, %v2610
      %v2612 = vmul.f32 %v2607, %v2611
      %vm2613 = vweird.f32 %v2530
      %vm2614 = vweird.f32 %v2607
      %vm2615 = vmor %vm2613, %vm2614
      %v2616 = vsel %vm2615, %v2607, %v2612
      %v2617 = vrsqrt.pop %v2531
      %v2618 = vmul.f32 %v2617, %v2531
      %v2619 = vmul.f32 %v2618, %v2617
      %v2620 = vmul.f32 0.5, %v2619
      %v2621 = vsub.f32 1.5, %v2620
      %v2622 = vmul.f32 %v2617, %v2621
      %vm2623 = vweird.f32 %v2531
      %vm2624 = vweird.f32 %v2617
      %vm2625 = vmor %vm2623, %vm2624
      %v2626 = vsel %vm2625, %v2617, %v2622
      %v2627 = vrsqrt.pop %v2532
      %v2628 = vmul.f32 %v2627, %v2532
      %v2629 = vmul.f32 %v2628, %v2627
      %v2630 = vmul.f32 0.5, %v2629
      %v2631 = vsub.f32 1.5, %v2630
      %v2632 = vmul.f32 %v2627, %v2631
      %vm2633 = vweird.f32 %v2532
      %vm2634 = vweird.f32 %v2627
      %vm2635 = vmor %vm2633, %vm2634
      %v2636 = vsel %vm2635, %v2627, %v2632
      %v2637 = vrsqrt.pop %v2533
      %v2638 = vmul.f32 %v2637, %v2533
      %v2639 = vmul.f32 %v2638, %v2637
      %v2640 = vmul.f32 0.5, %v2639
      %v2641 = vsub.f32 1.5, %v2640
      %v2642 = vmul.f32 %v2637, %v2641
      %vm2643 = vweird.f32 %v2533
      %vm2644 = vweird.f32 %v2637
      %vm2645 = vmor %vm2643, %vm2644
      %v2646 = vsel %vm2645, %v2637, %v2642
      %v2647 = vrsqrt.pop %v2534
      %v2648 = vmul.f32 %v2647, %v2534
      %v2649 = vmul.f32 %v2648, %v2647
      %v2650 = vmul.f32 0.5, %v2649
      %v2651 = vsub.f32 1.5, %v2650
      %v2652 = vmul.f32 %v2647, %v2651
      %vm2653 = vweird.f32 %v2534
      %vm2654 = vweird.f32 %v2647
      %vm2655 = vmor %vm2653, %vm2654
      %v2656 = vsel %vm2655, %v2647, %v2652
      %v2657 = vrsqrt.pop %v2535
      %v2658 = vmul.f32 %v2657, %v2535
      %v2659 = vmul.f32 %v2658, %v2657
      %v2660 = vmul.f32 0.5, %v2659
      %v2661 = vsub.f32 1.5, %v2660
      %v2662 = vmul.f32 %v2657, %v2661
      %vm2663 = vweird.f32 %v2535
      %vm2664 = vweird.f32 %v2657
      %vm2665 = vmor %vm2663, %vm2664
      %v2666 = vsel %vm2665, %v2657, %v2662
      %v2667 = vrsqrt.pop %v2536
      %v2668 = vmul.f32 %v2667, %v2536
      %v2669 = vmul.f32 %v2668, %v2667
      %v2670 = vmul.f32 0.5, %v2669
      %v2671 = vsub.f32 1.5, %v2670
      %v2672 = vmul.f32 %v2667, %v2671
      %vm2673 = vweird.f32 %v2536
      %vm2674 = vweird.f32 %v2667
      %vm2675 = vmor %vm2673, %vm2674
      %v2676 = vsel %vm2675, %v2667, %v2672
      %v2677 = vrsqrt.pop %v2537
      %v2678 = vmul.f32 %v2677, %v2537
      %v2679 = vmul.f32 %v2678, %v2677
      %v2680 = vmul.f32 0.5, %v2679
      %v2681 = vsub.f32 1.5, %v2680
      %v2682 = vmul.f32 %v2677, %v2681
      %vm2683 = vweird.f32 %v2537
      %vm2684 = vweird.f32 %v2677
      %vm2685 = vmor %vm2683, %vm2684
      %v2686 = vsel %vm2685, %v2677, %v2682
      %v2687 = vrsqrt.pop %v2538
      %v2688 = vmul.f32 %v2687, %v2538
      %v2689 = vmul.f32 %v2688, %v2687
      %v2690 = vmul.f32 0.5, %v2689
      %v2691 = vsub.f32 1.5, %v2690
      %v2692 = vmul.f32 %v2687, %v2691
      %vm2693 = vweird.f32 %v2538
      %vm2694 = vweird.f32 %v2687
      %vm2695 = vmor %vm2693, %vm2694
      %v2696 = vsel %vm2695, %v2687, %v2692
      %v2697 = vrsqrt.pop %v2539
      %v2698 = vmul.f32 %v2697, %v2539
      %v2699 = vmul.f32 %v2698, %v2697
      %v2700 = vmul.f32 0.5, %v2699
      %v2701 = vsub.f32 1.5, %v2700
      %v2702 = vmul.f32 %v2697, %v2701
      %vm2703 = vweird.f32 %v2539
      %vm2704 = vweird.f32 %v2697
      %vm2705 = vmor %vm2703, %vm2704
      %v2706 = vsel %vm2705, %v2697, %v2702
      %v2707 = vrsqrt.pop %v2540
      %v2708 = vmul.f32 %v2707, %v2540
      %v2709 = vmul.f32 %v2708, %v2707
      %v2710 = vmul.f32 0.5, %v2709
      %v2711 = vsub.f32 1.5, %v2710
      %v2712 = vmul.f32 %v2707, %v2711
      %vm2713 = vweird.f32 %v2540
      %vm2714 = vweird.f32 %v2707
      %vm2715 = vmor %vm2713, %vm2714
      %v2716 = vsel %vm2715, %v2707, %v2712
      %v2717 = vrsqrt.pop %v2541
      %v2718 = vmul.f32 %v2717, %v2541
      %v2719 = vmul.f32 %v2718, %v2717
      %v2720 = vmul.f32 0.5, %v2719
      %v2721 = vsub.f32 1.5, %v2720
      %v2722 = vmul.f32 %v2717, %v2721
      %vm2723 = vweird.f32 %v2541
      %vm2724 = vweird.f32 %v2717
      %vm2725 = vmor %vm2723, %vm2724
      %v2726 = vsel %vm2725, %v2717, %v2722
      %v2727 = vrsqrt.pop %v2542
      %v2728 = vmul.f32 %v2727, %v2542
      %v2729 = vmul.f32 %v2728, %v2727
      %v2730 = vmul.f32 0.5, %v2729
      %v2731 = vsub.f32 1.5, %v2730
      %v2732 = vmul.f32 %v2727, %v2731
      %vm2733 = vweird.f32 %v2542
      %vm2734 = vweird.f32 %v2727
      %vm2735 = vmor %vm2733, %vm2734
      %v2736 = vsel %vm2735, %v2727, %v2732
      %v2737 = vrsqrt.pop %v2543
      %v2738 = vmul.f32 %v2737, %v2543
      %v2739 = vmul.f32 %v2738, %v2737
      %v2740 = vmul.f32 0.5, %v2739
      %v2741 = vsub.f32 1.5, %v2740
      %v2742 = vmul.f32 %v2737, %v2741
      %vm2743 = vweird.f32 %v2543
      %vm2744 = vweird.f32 %v2737
      %vm2745 = vmor %vm2743, %vm2744
      %v2746 = vsel %vm2745, %v2737, %v2742
      %v2747 = vrsqrt.pop %v2544
      %v2748 = vmul.f32 %v2747, %v2544
      %v2749 = vmul.f32 %v2748, %v2747
      %v2750 = vmul.f32 0.5, %v2749
      %v2751 = vsub.f32 1.5, %v2750
      %v2752 = vmul.f32 %v2747, %v2751
      %vm2753 = vweird.f32 %v2544
      %vm2754 = vweird.f32 %v2747
      %vm2755 = vmor %vm2753, %vm2754
      %v2756 = vsel %vm2755, %v2747, %v2752
      %v2757 = vrsqrt.pop %v2545
      %v2758 = vmul.f32 %v2757, %v2545
      %v2759 = vmul.f32 %v2758, %v2757
      %v2760 = vmul.f32 0.5, %v2759
      %v2761 = vsub.f32 1.5, %v2760
      %v2762 = vmul.f32 %v2757, %v2761
      %vm2763 = vweird.f32 %v2545
      %vm2764 = vweird.f32 %v2757
      %vm2765 = vmor %vm2763, %vm2764
      %v2766 = vsel %vm2765, %v2757, %v2762
      %v2767 = vrsqrt.pop %v2546
      %v2768 = vmul.f32 %v2767, %v2546
      %v2769 = vmul.f32 %v2768, %v2767
      %v2770 = vmul.f32 0.5, %v2769
      %v2771 = vsub.f32 1.5, %v2770
      %v2772 = vmul.f32 %v2767, %v2771
      %vm2773 = vweird.f32 %v2546
      %vm2774 = vweird.f32 %v2767
      %vm2775 = vmor %vm2773, %vm2774
      %v2776 = vsel %vm2775, %v2767, %v2772
      %v2777 = vrsqrt.pop %v2547
      %v2778 = vmul.f32 %v2777, %v2547
      %v2779 = vmul.f32 %v2778, %v2777
      %v2780 = vmul.f32 0.5, %v2779
      %v2781 = vsub.f32 1.5, %v2780
      %v2782 = vmul.f32 %v2777, %v2781
      %vm2783 = vweird.f32 %v2547
      %vm2784 = vweird.f32 %v2777
      %vm2785 = vmor %vm2783, %vm2784
      %v2786 = vsel %vm2785, %v2777, %v2782
      %v2787 = vrsqrt.pop %v2548
      %v2788 = vmul.f32 %v2787, %v2548
      %v2789 = vmul.f32 %v2788, %v2787
      %v2790 = vmul.f32 0.5, %v2789
      %v2791 = vsub.f32 1.5, %v2790
      %v2792 = vmul.f32 %v2787, %v2791
      %vm2793 = vweird.f32 %v2548
      %vm2794 = vweird.f32 %v2787
      %vm2795 = vmor %vm2793, %vm2794
      %v2796 = vsel %vm2795, %v2787, %v2792
      %v2797 = vrsqrt.pop %v2549
      %v2798 = vmul.f32 %v2797, %v2549
      %v2799 = vmul.f32 %v2798, %v2797
      %v2800 = vmul.f32 0.5, %v2799
      %v2801 = vsub.f32 1.5, %v2800
      %v2802 = vmul.f32 %v2797, %v2801
      %vm2803 = vweird.f32 %v2549
      %vm2804 = vweird.f32 %v2797
      %vm2805 = vmor %vm2803, %vm2804
      %v2806 = vsel %vm2805, %v2797, %v2802
      %v2807 = vrsqrt.pop %v2550
      %v2808 = vmul.f32 %v2807, %v2550
      %v2809 = vmul.f32 %v2808, %v2807
      %v2810 = vmul.f32 0.5, %v2809
      %v2811 = vsub.f32 1.5, %v2810
      %v2812 = vmul.f32 %v2807, %v2811
      %vm2813 = vweird.f32 %v2550
      %vm2814 = vweird.f32 %v2807
      %vm2815 = vmor %vm2813, %vm2814
      %v2816 = vsel %vm2815, %v2807, %v2812
      %v2817 = vrsqrt.pop %v2551
      %v2818 = vmul.f32 %v2817, %v2551
      %v2819 = vmul.f32 %v2818, %v2817
      %v2820 = vmul.f32 0.5, %v2819
      %v2821 = vsub.f32 1.5, %v2820
      %v2822 = vmul.f32 %v2817, %v2821
      %vm2823 = vweird.f32 %v2551
      %vm2824 = vweird.f32 %v2817
      %vm2825 = vmor %vm2823, %vm2824
      %v2826 = vsel %vm2825, %v2817, %v2822
      %v2827 = vrsqrt.pop %v2552
      %v2828 = vmul.f32 %v2827, %v2552
      %v2829 = vmul.f32 %v2828, %v2827
      %v2830 = vmul.f32 0.5, %v2829
      %v2831 = vsub.f32 1.5, %v2830
      %v2832 = vmul.f32 %v2827, %v2831
      %vm2833 = vweird.f32 %v2552
      %vm2834 = vweird.f32 %v2827
      %vm2835 = vmor %vm2833, %vm2834
      %v2836 = vsel %vm2835, %v2827, %v2832
      %v2837 = vrsqrt.pop %v2553
      %v2838 = vmul.f32 %v2837, %v2553
      %v2839 = vmul.f32 %v2838, %v2837
      %v2840 = vmul.f32 0.5, %v2839
      %v2841 = vsub.f32 1.5, %v2840
      %v2842 = vmul.f32 %v2837, %v2841
      %vm2843 = vweird.f32 %v2553
      %vm2844 = vweird.f32 %v2837
      %vm2845 = vmor %vm2843, %vm2844
      %v2846 = vsel %vm2845, %v2837, %v2842
      %v2847 = vrsqrt.pop %v2554
      %v2848 = vmul.f32 %v2847, %v2554
      %v2849 = vmul.f32 %v2848, %v2847
      %v2850 = vmul.f32 0.5, %v2849
      %v2851 = vsub.f32 1.5, %v2850
      %v2852 = vmul.f32 %v2847, %v2851
      %vm2853 = vweird.f32 %v2554
      %vm2854 = vweird.f32 %v2847
      %vm2855 = vmor %vm2853, %vm2854
      %v2856 = vsel %vm2855, %v2847, %v2852
      %v2857 = vrsqrt.pop %v2555
      %v2858 = vmul.f32 %v2857, %v2555
      %v2859 = vmul.f32 %v2858, %v2857
      %v2860 = vmul.f32 0.5, %v2859
      %v2861 = vsub.f32 1.5, %v2860
      %v2862 = vmul.f32 %v2857, %v2861
      %vm2863 = vweird.f32 %v2555
      %vm2864 = vweird.f32 %v2857
      %vm2865 = vmor %vm2863, %vm2864
      %v2866 = vsel %vm2865, %v2857, %v2862
      %v2867 = vrsqrt.pop %v2556
      %v2868 = vmul.f32 %v2867, %v2556
      %v2869 = vmul.f32 %v2868, %v2867
      %v2870 = vmul.f32 0.5, %v2869
      %v2871 = vsub.f32 1.5, %v2870
      %v2872 = vmul.f32 %v2867, %v2871
      %vm2873 = vweird.f32 %v2556
      %vm2874 = vweird.f32 %v2867
      %vm2875 = vmor %vm2873, %vm2874
      %v2876 = vsel %vm2875, %v2867, %v2872
      %v2877 = vmul.f32 %v2493, %v2566
      %v2878 = vmul.f32 %v2494, %v2576
      %v2879 = vmul.f32 %v2495, %v2586
      %v2880 = vmul.f32 %v2496, %v2596
      %v2881 = vmul.f32 %v2497, %v2606
      %v2882 = vmul.f32 %v2498, %v2616
      %v2883 = vmul.f32 %v2499, %v2626
      %v2884 = vmul.f32 %v2500, %v2636
      %v2885 = vmul.f32 %v2501, %v2646
      %v2886 = vmul.f32 %v2502, %v2656
      %v2887 = vmul.f32 %v2503, %v2666
      %v2888 = vmul.f32 %v2504, %v2676
      %v2889 = vmul.f32 %v2505, %v2686
      %v2890 = vmul.f32 %v2506, %v2696
      %v2891 = vmul.f32 %v2507, %v2706
      %v2892 = vmul.f32 %v2508, %v2716
      %v2893 = vmul.f32 %v2509, %v2726
      %v2894 = vmul.f32 %v2510, %v2736
      %v2895 = vmul.f32 %v2511, %v2746
      %v2896 = vmul.f32 %v2512, %v2756
      %v2897 = vmul.f32 %v2513, %v2766
      %v2898 = vmul.f32 %v2514, %v2776
      %v2899 = vmul.f32 %v2515, %v2786
      %v2900 = vmul.f32 %v2516, %v2796
      %v2901 = vmul.f32 %v2517, %v2806
      %v2902 = vmul.f32 %v2518, %v2816
      %v2903 = vmul.f32 %v2519, %v2826
      %v2904 = vmul.f32 %v2520, %v2836
      %v2905 = vmul.f32 %v2521, %v2846
      %v2906 = vmul.f32 %v2522, %v2856
      %v2907 = vmul.f32 %v2523, %v2866
      %v2908 = vmul.f32 %v2524, %v2876
      %v2909 = vperm.slane %v315, 0
      %v2910 = vmul.f32 %v2877, %v2909
      %v2911 = vmul.f32 %v2878, %v2909
      %v2912 = vmul.f32 %v2879, %v2909
      %v2913 = vmul.f32 %v2880, %v2909
      %v2914 = vmul.f32 %v2881, %v2909
      %v2915 = vmul.f32 %v2882, %v2909
      %v2916 = vmul.f32 %v2883, %v2909
      %v2917 = vmul.f32 %v2884, %v2909
      %v2918 = vmul.f32 %v2885, %v2909
      %v2919 = vmul.f32 %v2886, %v2909
      %v2920 = vmul.f32 %v2887, %v2909
      %v2921 = vmul.f32 %v2888, %v2909
      %v2922 = vmul.f32 %v2889, %v2909
      %v2923 = vmul.f32 %v2890, %v2909
      %v2924 = vmul.f32 %v2891, %v2909
      %v2925 = vmul.f32 %v2892, %v2909
      %v2926 = vmul.f32 %v2893, %v2909
      %v2927 = vmul.f32 %v2894, %v2909
      %v2928 = vmul.f32 %v2895, %v2909
      %v2929 = vmul.f32 %v2896, %v2909
      %v2930 = vmul.f32 %v2897, %v2909
      %v2931 = vmul.f32 %v2898, %v2909
      %v2932 = vmul.f32 %v2899, %v2909
      %v2933 = vmul.f32 %v2900, %v2909
      %v2934 = vmul.f32 %v2901, %v2909
      %v2935 = vmul.f32 %v2902, %v2909
      %v2936 = vmul.f32 %v2903, %v2909
      %v2937 = vmul.f32 %v2904, %v2909
      %v2938 = vmul.f32 %v2905, %v2909
      %v2939 = vmul.f32 %v2906, %v2909
      %v2940 = vmul.f32 %v2907, %v2909
      %v2941 = vmul.f32 %v2908, %v2909
      %v2942 = vperm.slane %v316, 0
      %v2943 = vadd.f32 %v2910, %v2942
      %v2944 = vadd.f32 %v2911, %v2942
      %v2945 = vadd.f32 %v2912, %v2942
      %v2946 = vadd.f32 %v2913, %v2942
      %v2947 = vadd.f32 %v2914, %v2942
      %v2948 = vadd.f32 %v2915, %v2942
      %v2949 = vadd.f32 %v2916, %v2942
      %v2950 = vadd.f32 %v2917, %v2942
      %v2951 = vadd.f32 %v2918, %v2942
      %v2952 = vadd.f32 %v2919, %v2942
      %v2953 = vadd.f32 %v2920, %v2942
      %v2954 = vadd.f32 %v2921, %v2942
      %v2955 = vadd.f32 %v2922, %v2942
      %v2956 = vadd.f32 %v2923, %v2942
      %v2957 = vadd.f32 %v2924, %v2942
      %v2958 = vadd.f32 %v2925, %v2942
      %v2959 = vadd.f32 %v2926, %v2942
      %v2960 = vadd.f32 %v2927, %v2942
      %v2961 = vadd.f32 %v2928, %v2942
      %v2962 = vadd.f32 %v2929, %v2942
      %v2963 = vadd.f32 %v2930, %v2942
      %v2964 = vadd.f32 %v2931, %v2942
      %v2965 = vadd.f32 %v2932, %v2942
      %v2966 = vadd.f32 %v2933, %v2942
      %v2967 = vadd.f32 %v2934, %v2942
      %v2968 = vadd.f32 %v2935, %v2942
      %v2969 = vadd.f32 %v2936, %v2942
      %v2970 = vadd.f32 %v2937, %v2942
      %v2971 = vadd.f32 %v2938, %v2942
      %v2972 = vadd.f32 %v2939, %v2942
      %v2973 = vadd.f32 %v2940, %v2942
      %v2974 = vadd.f32 %v2941, %v2942
      %v2975 = vld [vmem:[%s5] sm:$0xff]
      %v2976 = vld [vmem:[%s5 + $0x8] sm:$0xff]
      %v2977 = vld [vmem:[%s5 + $0x10] sm:$0xff]
      %v2978 = vld [vmem:[%s5 + $0x18] sm:$0xff]
      %v2979 = vld [vmem:[%s6] sm:$0x1]
      %v2981 = vperm.slane %v2979, 0
      %v2984 = vsel %vm322, %v2943, 0
      %v2987 = vsel %vm322, %v2944, 0
      %v2990 = vsel %vm322, %v2945, 0
      %v2993 = vsel %vm322, %v2946, 0
      %v2996 = vsel %vm322, %v2947, 0
      %v2999 = vsel %vm322, %v2948, 0
      %v3002 = vsel %vm322, %v2949, 0
      %v3005 = vsel %vm322, %v2950, 0
      %v3008 = vsel %vm322, %v2951, 0
      %v3011 = vsel %vm322, %v2952, 0
      %v3014 = vsel %vm322, %v2953, 0
      %v3017 = vsel %vm322, %v2954, 0
      %v3020 = vsel %vm322, %v2955, 0
      %v3023 = vsel %vm322, %v2956, 0
      %v3026 = vsel %vm322, %v2957, 0
      %v3029 = vsel %vm322, %v2958, 0
      %v3032 = vsel %vm322, %v2959, 0
      %v3035 = vsel %vm322, %v2960, 0
      %v3038 = vsel %vm322, %v2961, 0
      %v3041 = vsel %vm322, %v2962, 0
      %v3044 = vsel %vm322, %v2963, 0
      %v3047 = vsel %vm322, %v2964, 0
      %v3050 = vsel %vm322, %v2965, 0
      %v3053 = vsel %vm322, %v2966, 0
      %v3056 = vsel %vm322, %v2967, 0
      %v3059 = vsel %vm322, %v2968, 0
      %v3062 = vsel %vm322, %v2969, 0
      %v3065 = vsel %vm322, %v2970, 0
      %v3068 = vsel %vm322, %v2971, 0
      %v3071 = vsel %vm322, %v2972, 0
      %v3074 = vsel %vm322, %v2973, 0
      %v3077 = vsel %vm322, %v2974, 0
      %3079 = vmatpush.msra.mxu0 0.0
      %3080 = vmatpush.msra.mxu0 0.0
      %3081 = vmatpush.msra.mxu0 0.0
      %3082 = vmatpush.msra.mxu0 0.0
      %3083 = vmatpush.msra.mxu0 0.0
      %3084 = vmatpush.msra.mxu0 0.0
      %3085 = vmatpush.msra.mxu0 0.0
      %3086 = vmatpush.msra.mxu0 0.0
      %3087 = vmatpush.msra.mxu0 0.0
      %3088 = vmatpush.msra.mxu0 0.0
      %3089 = vmatpush.msra.mxu0 0.0
      %3090 = vmatpush.msra.mxu0 0.0
      %3091 = vmatpush.msra.mxu0 %v2978
      %3092 = vmatpush.msra.mxu0 %v2977
      %3093 = vmatpush.msra.mxu0 %v2976
      %3094 = vmatpush.msra.mxu0 %v2975
      %3095 = vmatmul.f32.gmra.mxu0 %v2984
      %v3096 = vpop.f32.mrf.mxu0
      %v3097 = vadd.f32 %v2981, %v3096
      %3098 = vmatmul.f32.gmra.mxu0 %v2987
      %v3099 = vpop.f32.mrf.mxu0
      %v3100 = vadd.f32 %v2981, %v3099
      %3101 = vmatmul.f32.gmra.mxu0 %v2990
      %v3102 = vpop.f32.mrf.mxu0
      %v3103 = vadd.f32 %v2981, %v3102
      %3104 = vmatmul.f32.gmra.mxu0 %v2993
      %v3105 = vpop.f32.mrf.mxu0
      %v3106 = vadd.f32 %v2981, %v3105
      %3107 = vmatmul.f32.gmra.mxu0 %v2996
      %v3108 = vpop.f32.mrf.mxu0
      %v3109 = vadd.f32 %v2981, %v3108
      %3110 = vmatmul.f32.gmra.mxu0 %v2999
      %v3111 = vpop.f32.mrf.mxu0
      %v3112 = vadd.f32 %v2981, %v3111
      %3113 = vmatmul.f32.gmra.mxu0 %v3002
      %v3114 = vpop.f32.mrf.mxu0
      %v3115 = vadd.f32 %v2981, %v3114
      %3116 = vmatmul.f32.gmra.mxu0 %v3005
      %v3117 = vpop.f32.mrf.mxu0
      %v3118 = vadd.f32 %v2981, %v3117
      %3119 = vmatmul.f32.gmra.mxu0 %v3008
      %v3120 = vpop.f32.mrf.mxu0
      %v3121 = vadd.f32 %v2981, %v3120
      %3122 = vmatmul.f32.gmra.mxu0 %v3011
      %v3123 = vpop.f32.mrf.mxu0
      %v3124 = vadd.f32 %v2981, %v3123
      %3125 = vmatmul.f32.gmra.mxu0 %v3014
      %v3126 = vpop.f32.mrf.mxu0
      %v3127 = vadd.f32 %v2981, %v3126
      %3128 = vmatmul.f32.gmra.mxu0 %v3017
      %v3129 = vpop.f32.mrf.mxu0
      %v3130 = vadd.f32 %v2981, %v3129
      %3131 = vmatmul.f32.gmra.mxu0 %v3020
      %v3132 = vpop.f32.mrf.mxu0
      %v3133 = vadd.f32 %v2981, %v3132
      %3134 = vmatmul.f32.gmra.mxu0 %v3023
      %v3135 = vpop.f32.mrf.mxu0
      %v3136 = vadd.f32 %v2981, %v3135
      %3137 = vmatmul.f32.gmra.mxu0 %v3026
      %v3138 = vpop.f32.mrf.mxu0
      %v3139 = vadd.f32 %v2981, %v3138
      %3140 = vmatmul.f32.gmra.mxu0 %v3029
      %v3141 = vpop.f32.mrf.mxu0
      %v3142 = vadd.f32 %v2981, %v3141
      %3143 = vmatmul.f32.gmra.mxu0 %v3032
      %v3144 = vpop.f32.mrf.mxu0
      %v3145 = vadd.f32 %v2981, %v3144
      %3146 = vmatmul.f32.gmra.mxu0 %v3035
      %v3147 = vpop.f32.mrf.mxu0
      %v3148 = vadd.f32 %v2981, %v3147
      %3149 = vmatmul.f32.gmra.mxu0 %v3038
      %v3150 = vpop.f32.mrf.mxu0
      %v3151 = vadd.f32 %v2981, %v3150
      %3152 = vmatmul.f32.gmra.mxu0 %v3041
      %v3153 = vpop.f32.mrf.mxu0
      %v3154 = vadd.f32 %v2981, %v3153
      %3155 = vmatmul.f32.gmra.mxu0 %v3044
      %v3156 = vpop.f32.mrf.mxu0
      %v3157 = vadd.f32 %v2981, %v3156
      %3158 = vmatmul.f32.gmra.mxu0 %v3047
      %v3159 = vpop.f32.mrf.mxu0
      %v3160 = vadd.f32 %v2981, %v3159
      %3161 = vmatmul.f32.gmra.mxu0 %v3050
      %v3162 = vpop.f32.mrf.mxu0
      %v3163 = vadd.f32 %v2981, %v3162
      %3164 = vmatmul.f32.gmra.mxu0 %v3053
      %v3165 = vpop.f32.mrf.mxu0
      %v3166 = vadd.f32 %v2981, %v3165
      %3167 = vmatmul.f32.gmra.mxu0 %v3056
      %v3168 = vpop.f32.mrf.mxu0
      %v3169 = vadd.f32 %v2981, %v3168
      %3170 = vmatmul.f32.gmra.mxu0 %v3059
      %v3171 = vpop.f32.mrf.mxu0
      %v3172 = vadd.f32 %v2981, %v3171
      %3173 = vmatmul.f32.gmra.mxu0 %v3062
      %v3174 = vpop.f32.mrf.mxu0
      %v3175 = vadd.f32 %v2981, %v3174
      %3176 = vmatmul.f32.gmra.mxu0 %v3065
      %v3177 = vpop.f32.mrf.mxu0
      %v3178 = vadd.f32 %v2981, %v3177
      %3179 = vmatmul.f32.gmra.mxu0 %v3068
      %v3180 = vpop.f32.mrf.mxu0
      %v3181 = vadd.f32 %v2981, %v3180
      %3182 = vmatmul.f32.gmra.mxu0 %v3071
      %v3183 = vpop.f32.mrf.mxu0
      %v3184 = vadd.f32 %v2981, %v3183
      %3185 = vmatmul.f32.gmra.mxu0 %v3074
      %v3186 = vpop.f32.mrf.mxu0
      %v3187 = vadd.f32 %v2981, %v3186
      %3188 = vmatmul.f32.gmra.mxu0 %v3077
      %v3189 = vpop.f32.mrf.mxu0
      %v3190 = vadd.f32 %v2981, %v3189
      %3191 = vdwg.mxu0
      %v3192 = vadd.f32 %v3097, %v282
      %v3193 = vadd.f32 %v3100, %v283
      %v3194 = vadd.f32 %v3103, %v284
      %v3195 = vadd.f32 %v3106, %v285
      %v3196 = vadd.f32 %v3109, %v286
      %v3197 = vadd.f32 %v3112, %v287
      %v3198 = vadd.f32 %v3115, %v288
      %v3199 = vadd.f32 %v3118, %v289
      %v3200 = vadd.f32 %v3121, %v290
      %v3201 = vadd.f32 %v3124, %v291
      %v3202 = vadd.f32 %v3127, %v292
      %v3203 = vadd.f32 %v3130, %v293
      %v3204 = vadd.f32 %v3133, %v294
      %v3205 = vadd.f32 %v3136, %v295
      %v3206 = vadd.f32 %v3139, %v296
      %v3207 = vadd.f32 %v3142, %v297
      %v3208 = vadd.f32 %v3145, %v298
      %v3209 = vadd.f32 %v3148, %v299
      %v3210 = vadd.f32 %v3151, %v300
      %v3211 = vadd.f32 %v3154, %v301
      %v3212 = vadd.f32 %v3157, %v302
      %v3213 = vadd.f32 %v3160, %v303
      %v3214 = vadd.f32 %v3163, %v304
      %v3215 = vadd.f32 %v3166, %v305
      %v3216 = vadd.f32 %v3169, %v306
      %v3217 = vadd.f32 %v3172, %v307
      %v3218 = vadd.f32 %v3175, %v308
      %v3219 = vadd.f32 %v3178, %v309
      %v3220 = vadd.f32 %v3181, %v310
      %v3221 = vadd.f32 %v3184, %v311
      %v3222 = vadd.f32 %v3187, %v312
      %v3223 = vadd.f32 %v3190, %v313
      %v3224 = vmax.f32 %v3192, 0.0
      %v3225 = vmax.f32 %v3193, 0.0
      %v3226 = vmax.f32 %v3194, 0.0
      %v3227 = vmax.f32 %v3195, 0.0
      %v3228 = vmax.f32 %v3196, 0.0
      %v3229 = vmax.f32 %v3197, 0.0
      %v3230 = vmax.f32 %v3198, 0.0
      %v3231 = vmax.f32 %v3199, 0.0
      %v3232 = vmax.f32 %v3200, 0.0
      %v3233 = vmax.f32 %v3201, 0.0
      %v3234 = vmax.f32 %v3202, 0.0
      %v3235 = vmax.f32 %v3203, 0.0
      %v3236 = vmax.f32 %v3204, 0.0
      %v3237 = vmax.f32 %v3205, 0.0
      %v3238 = vmax.f32 %v3206, 0.0
      %v3239 = vmax.f32 %v3207, 0.0
      %v3240 = vmax.f32 %v3208, 0.0
      %v3241 = vmax.f32 %v3209, 0.0
      %v3242 = vmax.f32 %v3210, 0.0
      %v3243 = vmax.f32 %v3211, 0.0
      %v3244 = vmax.f32 %v3212, 0.0
      %v3245 = vmax.f32 %v3213, 0.0
      %v3246 = vmax.f32 %v3214, 0.0
      %v3247 = vmax.f32 %v3215, 0.0
      %v3248 = vmax.f32 %v3216, 0.0
      %v3249 = vmax.f32 %v3217, 0.0
      %v3250 = vmax.f32 %v3218, 0.0
      %v3251 = vmax.f32 %v3219, 0.0
      %v3252 = vmax.f32 %v3220, 0.0
      %v3253 = vmax.f32 %v3221, 0.0
      %v3254 = vmax.f32 %v3222, 0.0
      %v3255 = vmax.f32 %v3223, 0.0
      %3256 = vst.msk [vmem:[%s280] sm:$0xff] %vm322, %v3224
      %3257 = vst.msk [vmem:[%s280 + $0x8] sm:$0xff] %vm322, %v3225
      %3258 = vst.msk [vmem:[%s280 + $0x10] sm:$0xff] %vm322, %v3226
      %3259 = vst.msk [vmem:[%s280 + $0x18] sm:$0xff] %vm322, %v3227
      %3260 = vst.msk [vmem:[%s280 + $0x20] sm:$0xff] %vm322, %v3228
      %3261 = vst.msk [vmem:[%s280 + $0x28] sm:$0xff] %vm322, %v3229
      %3262 = vst.msk [vmem:[%s280 + $0x30] sm:$0xff] %vm322, %v3230
      %3263 = vst.msk [vmem:[%s280 + $0x38] sm:$0xff] %vm322, %v3231
      %3264 = vst.msk [vmem:[%s280 + $0x40] sm:$0xff] %vm322, %v3232
      %3265 = vst.msk [vmem:[%s280 + $0x48] sm:$0xff] %vm322, %v3233
      %3266 = vst.msk [vmem:[%s280 + $0x50] sm:$0xff] %vm322, %v3234
      %3267 = vst.msk [vmem:[%s280 + $0x58] sm:$0xff] %vm322, %v3235
      %3268 = vst.msk [vmem:[%s280 + $0x60] sm:$0xff] %vm322, %v3236
      %3269 = vst.msk [vmem:[%s280 + $0x68] sm:$0xff] %vm322, %v3237
      %3270 = vst.msk [vmem:[%s280 + $0x70] sm:$0xff] %vm322, %v3238
      %3271 = vst.msk [vmem:[%s280 + $0x78] sm:$0xff] %vm322, %v3239
      %3272 = vst.msk [vmem:[%s280 + $0x80] sm:$0xff] %vm322, %v3240
      %3273 = vst.msk [vmem:[%s280 + $0x88] sm:$0xff] %vm322, %v3241
      %3274 = vst.msk [vmem:[%s280 + $0x90] sm:$0xff] %vm322, %v3242
      %3275 = vst.msk [vmem:[%s280 + $0x98] sm:$0xff] %vm322, %v3243
      %3276 = vst.msk [vmem:[%s280 + $0xa0] sm:$0xff] %vm322, %v3244
      %3277 = vst.msk [vmem:[%s280 + $0xa8] sm:$0xff] %vm322, %v3245
      %3278 = vst.msk [vmem:[%s280 + $0xb0] sm:$0xff] %vm322, %v3246
      %3279 = vst.msk [vmem:[%s280 + $0xb8] sm:$0xff] %vm322, %v3247
      %3280 = vst.msk [vmem:[%s280 + $0xc0] sm:$0xff] %vm322, %v3248
      %3281 = vst.msk [vmem:[%s280 + $0xc8] sm:$0xff] %vm322, %v3249
      %3282 = vst.msk [vmem:[%s280 + $0xd0] sm:$0xff] %vm322, %v3250
      %3283 = vst.msk [vmem:[%s280 + $0xd8] sm:$0xff] %vm322, %v3251
      %3284 = vst.msk [vmem:[%s280 + $0xe0] sm:$0xff] %vm322, %v3252
      %3285 = vst.msk [vmem:[%s280 + $0xe8] sm:$0xff] %vm322, %v3253
      %3286 = vst.msk [vmem:[%s280 + $0xf0] sm:$0xff] %vm322, %v3254
      %3287 = vst.msk [vmem:[%s280 + $0xf8] sm:$0xff] %vm322, %v3255
      %s3288 = smul.u32 32, %s18
      %p3289 = scmp.lt.s32.totalorder %s3288, 63
      %s3290 = scalar_select %p3289, %s3288, 63
      %s3291 = smul.addr %s3290, 8
      %s3292 = scalar_lea.vmem %s7, %s3291
      // Predicated region
      $region49: #{tpu_custom_call.1} parent=47 // pred_check
        %p3293 = pneg %p188
      $region50: #{tpu_custom_call.1} parent=47 // pred_check_branch
        %3295 = sbr.rel (%p3293) target = $region52
      $region51: #{tpu_custom_call.1} parent=47 // pred_region
        %s3296 = smul.u32 32, %s18
      $region52: #{tpu_custom_call.1} parent=47 // pred_fallthru
        _
    $region48: #{tpu_custom_call.1} parent=5 // pred_fallthru
      _
    %p3297 = scmp.le.s32.totalorder 2, %s13
    // Predicated region
    $region53: #{tpu_custom_call.1} parent=5 // pred_check
      %p3298 = pneg %p3297
    $region54: #{tpu_custom_call.1} parent=5 // pred_check_branch
      %3300 = sbr.rel (%p3298) target = $region56
    $region55: #{tpu_custom_call.1} parent=5 // pred_region
      %s3301 = ssub.s32 %s13, 2
      // Predicated region
      $region57: #{tpu_custom_call.1} parent=55 // pred_check
        %p3302 = pneg %p194
      $region58: #{tpu_custom_call.1} parent=55 // pred_check_branch
        %3304 = sbr.rel (%p3302) target = $region60
      $region59: #{tpu_custom_call.1} parent=55 // pred_region
        %s3305 = smul.u32 32, %s19
        %p3306 = scmp.lt.s32.totalorder %s3305, 63
        %s3307 = scalar_select %p3306, %s3305, 63
        %s3308 = smul.addr %s3307, 8
        %s3309 = scalar_lea.vmem %s7, %s3308
      $region60: #{tpu_custom_call.1} parent=55 // pred_fallthru
        _
    $region56: #{tpu_custom_call.1} parent=5 // pred_fallthru
      _
  $region6: #{tpu_custom_call.1} parent=0 // loop_footer
    %s17 = sadd.s32 1, %s13
  $region7: #{tpu_custom_call.1} parent=0 // loop_footer_branch
    %12 = sbr.rel target = $region3
  $region8: #{tpu_custom_call.1} parent=0 // loop_exit
    _

</llo_original>
